<compile_context>
chip_gen: v7x
topology: tpu7x:2x2x1
jax: 0.10.0
libtpu: 0.0.40
codegen_flags: <defaults>
</compile_context>

<pallas_src>
import jax
import jax.numpy as jnp
from jax import lax
from jax.experimental import pallas as pl
from jax.experimental.pallas import tpu as pltpu


# ---------------------------------------------------------------------------
# Pallas kernel: full 2-layer LSTM recurrence + final linear projection.
# ---------------------------------------------------------------------------
def lstm_kernel(x_ref,
                wih0_ref, whh0_ref, b0_ref,
                w1cat_ref, b1_ref,
                wlin_ref, blin_ref,
                out_ref,
                xproj_ref):
    T = x_ref.shape[0]
    H = whh0_ref.shape[0]

    # --- Hoisted, time-invariant layer-0 input projection: one M=T matmul. ---
    xproj_ref[...] = (jnp.dot(x_ref[...], wih0_ref[...],
                              preferred_element_type=jnp.float32)
                      + b0_ref[...])

    whh0 = whh0_ref[...]          # (H, 4H)
    w1cat = w1cat_ref[...]        # (2H, 4H) = [W_ih1; W_hh1]
    b1 = b1_ref[...]              # (1, 4H)

    def gates(g):
        # Full-width sigmoid/tanh over the whole (1, 4H) vector, then slice.
        s = jax.nn.sigmoid(g)
        t = jnp.tanh(g)
        i_g = s[:, 0 * H:1 * H]
        f_g = s[:, 1 * H:2 * H]
        g_g = t[:, 2 * H:3 * H]
        o_g = s[:, 3 * H:4 * H]
        return i_g, f_g, g_g, o_g

    def step(t, carry):
        h0, c0, h1, c1 = carry

        # Layer 0: only the recurrent matmul is on the serial chain now.
        g0 = xproj_ref[pl.ds(t, 1), :] + jnp.dot(
            h0, whh0, preferred_element_type=jnp.float32)
        i0, f0, gg0, o0 = gates(g0)
        c0 = f0 * c0 + i0 * gg0
        h0 = o0 * jnp.tanh(c0)

        # Layer 1: single fused matmul, K = 2H.
        hin = jnp.concatenate([h0, h1], axis=-1)        # (1, 2H)
        g1 = jnp.dot(hin, w1cat, preferred_element_type=jnp.float32) + b1
        i1, f1, gg1, o1 = gates(g1)
        c1 = f1 * c1 + i1 * gg1
        h1 = o1 * jnp.tanh(c1)

        return (h0, c0, h1, c1)

    zeros = jnp.zeros((1, H), jnp.float32)
    # T is static -> full unroll gives the scheduler cross-step visibility.
    h0, c0, h1, c1 = lax.fori_loop(0, T, step, (zeros, zeros, zeros, zeros),
                                   unroll=True)

    # pred[-1]: linear projection of the last top-layer hidden state.
    out_ref[...] = (jnp.dot(h1, wlin_ref[...],
                            preferred_element_type=jnp.float32)
                    + blin_ref[...])


# ---------------------------------------------------------------------------
# Wrapper
# ---------------------------------------------------------------------------
def lstm_network_forward(seq, params):
    """seq: (T,) float32.  Returns (output_size,) — matches pred[-1]."""
    T = seq.shape[0]
    x = seq.reshape(T, -1).astype(jnp.float32)      # (T, input_size), batch=1

    (wih0, whh0, b0, wih1, whh1, b1, wlin, blin) = params
    H = whh0.shape[0]
    output_size = wlin.shape[1]

    # Fuse layer-1 weights once on the host side: [W_ih1; W_hh1] -> (2H, 4H).
    w1cat = jnp.concatenate([wih1, whh1], axis=0)

    vmem = pl.BlockSpec(memory_space=pltpu.MemorySpace.VMEM)
    out = pl.pallas_call(
        lstm_kernel,
        out_shape=jax.ShapeDtypeStruct((1, output_size), jnp.float32),
        in_specs=[vmem] * 8,
        out_specs=vmem,
        scratch_shapes=[pltpu.VMEM((T, 4 * H), jnp.float32)],
    )(x, wih0, whh0, b0, w1cat, b1, wlin, blin)
    return out.reshape(output_size)


# ---------------------------------------------------------------------------
# Deterministic parameter construction (synthetic, PyTorch-shaped)
# ---------------------------------------------------------------------------
def make_params(key, input_size, hidden_size, output_size):
    H = hidden_size
    bound = 1.0 / jnp.sqrt(jnp.float32(H))
    keys = jax.random.split(key, 10)

    def u(k, shape):
        return jax.random.uniform(k, shape, jnp.float32, -bound, bound)

    # Stored as (fan_in, 4H) / (fan_in, out) — transposed vs. PyTorch.
    wih0 = u(keys[0], (input_size, 4 * H))
    whh0 = u(keys[1], (H, 4 * H))
    b0 = u(keys[2], (1, 4 * H)) + u(keys[3], (1, 4 * H))   # b_ih0 + b_hh0
    wih1 = u(keys[4], (H, 4 * H))
    whh1 = u(keys[5], (H, 4 * H))
    b1 = u(keys[6], (1, 4 * H)) + u(keys[7], (1, 4 * H))   # b_ih1 + b_hh1
    wlin = u(keys[8], (H, output_size))
    blin = u(keys[9], (1, output_size))
    return (wih0, whh0, b0, wih1, whh1, b1, wlin, blin)


# ---------------------------------------------------------------------------
# Pure-JAX reference (mirrors PyTorch nn.LSTM semantics) for a sanity check.
# ---------------------------------------------------------------------------
def reference_forward(seq, params):
    (wih0, whh0, b0, wih1, whh1, b1, wlin, blin) = params
    H = whh0.shape[0]
    x = seq.reshape(len(seq), -1).astype(jnp.float32)

    def cell(x_t, h, c, wih, whh, b):
        g = x_t @ wih + h @ whh + b
        i = jax.nn.sigmoid(g[:, 0 * H:1 * H])
        f = jax.nn.sigmoid(g[:, 1 * H:2 * H])
        gg = jnp.tanh(g[:, 2 * H:3 * H])
        o = jax.nn.sigmoid(g[:, 3 * H:4 * H])
        c = f * c + i * gg
        return o * jnp.tanh(c), c

    h0 = c0 = h1 = c1 = jnp.zeros((1, H), jnp.float32)
    for t in range(x.shape[0]):
        h0, c0 = cell(x[t:t + 1], h0, c0, wih0, whh0, b0)
        h1, c1 = cell(h0, h1, c1, wih1, whh1, b1)
    return (h1 @ wlin + blin).reshape(-1)


if __name__ == "__main__":
    key = jax.random.PRNGKey(0)
    k_seq, k_par = jax.random.split(key)

    T = 8
    input_size = 1
    hidden_size = 64     # matches the module's default hidden_size
    output_size = 1

    seq = jax.random.normal(k_seq, (T,), jnp.float32)
    params = make_params(k_par, input_size, hidden_size, output_size)

    pred_last = lstm_network_forward(seq, params)
    jax.block_until_ready(pred_last)

    ref = reference_forward(seq, params)
    assert pred_last.shape == (output_size,)
    assert jnp.allclose(pred_last, ref, atol=1e-5, rtol=1e-4), (pred_last, ref)

    print("KERNEL_OK")
</pallas_src>

<mosaic_0001>
module attributes {stable_mosaic.version = 11 : i64} {
  func.func @lstm_kernel(%arg0: memref<8x1xf32, #tpu.memory_space<vmem>>, %arg1: memref<1x256xf32, #tpu.memory_space<vmem>>, %arg2: memref<64x256xf32, #tpu.memory_space<vmem>>, %arg3: memref<1x256xf32, #tpu.memory_space<vmem>>, %arg4: memref<128x256xf32, #tpu.memory_space<vmem>>, %arg5: memref<1x256xf32, #tpu.memory_space<vmem>>, %arg6: memref<64x1xf32, #tpu.memory_space<vmem>>, %arg7: memref<1x1xf32, #tpu.memory_space<vmem>>, %arg8: memref<1x1xf32, #tpu.memory_space<vmem>>, %arg9: memref<8x256xf32, #tpu.memory_space<vmem>>) attributes {dimension_semantics = [], scalar_prefetch = 0 : i64, scratch_operands = 1 : i64, tpu.core_type = #tpu.core_type<tc>} {
    %c0 = arith.constant 0 : index
    %c0_0 = arith.constant 0 : index
    %0 = vector.load %arg0[%c0, %c0_0] : memref<8x1xf32, #tpu.memory_space<vmem>>, vector<8x1xf32>
    %c0_1 = arith.constant 0 : index
    %c0_2 = arith.constant 0 : index
    %1 = vector.load %arg1[%c0_1, %c0_2] : memref<1x256xf32, #tpu.memory_space<vmem>>, vector<1x256xf32>
    %cst = arith.constant dense<0.000000e+00> : vector<8x256xf32>
    %2 = tpu.matmul %0, %1, %cst {dimension_numbers = #tpu.dot_dimension_numbers<[1], [0], [0], [1], [0, 0, 1, 1], [], []>} : vector<8x1xf32>, vector<1x256xf32>, vector<8x256xf32> -> vector<8x256xf32>
    %c0_3 = arith.constant 0 : index
    %c0_4 = arith.constant 0 : index
    %3 = vector.load %arg3[%c0_3, %c0_4] : memref<1x256xf32, #tpu.memory_space<vmem>>, vector<1x256xf32>
    %4 = vector.broadcast %3 : vector<1x256xf32> to vector<8x256xf32>
    %5 = arith.addf %2, %4 : vector<8x256xf32>
    %c0_5 = arith.constant 0 : index
    %c0_6 = arith.constant 0 : index
    %6 = vector.load %arg9[%c0_5, %c0_6] : memref<8x256xf32, #tpu.memory_space<vmem>>, vector<8x256xf32>
    tpu.vector_store %arg9[%c0_5, %c0_6], %5 {strides = array<i32>} : memref<8x256xf32, #tpu.memory_space<vmem>>, vector<8x256xf32>,
    %c0_7 = arith.constant 0 : index
    %c0_8 = arith.constant 0 : index
    %7 = vector.load %arg2[%c0_7, %c0_8] : memref<64x256xf32, #tpu.memory_space<vmem>>, vector<64x256xf32>
    %c0_9 = arith.constant 0 : index
    %c0_10 = arith.constant 0 : index
    %8 = vector.load %arg4[%c0_9, %c0_10] : memref<128x256xf32, #tpu.memory_space<vmem>>, vector<128x256xf32>
    %c0_11 = arith.constant 0 : index
    %c0_12 = arith.constant 0 : index
    %9 = vector.load %arg5[%c0_11, %c0_12] : memref<1x256xf32, #tpu.memory_space<vmem>>, vector<1x256xf32>
    %cst_13 = arith.constant 0.000000e+00 : f32
    %10 = vector.broadcast %cst_13 : f32 to vector<1x64xf32>
    %c0_i32 = arith.constant 0 : i32
    %11 = arith.index_cast %c0_i32 : i32 to index
    %c0_14 = arith.constant 0 : index
    %12 = vector.load %arg9[%11, %c0_14] : memref<8x256xf32, #tpu.memory_space<vmem>>, vector<1x256xf32>
    %cst_15 = arith.constant dense<0.000000e+00> : vector<1x256xf32>
    %13 = tpu.matmul %10, %7, %cst_15 {dimension_numbers = #tpu.dot_dimension_numbers<[1], [0], [0], [1], [0, 0, 1, 1], [], []>} : vector<1x64xf32>, vector<64x256xf32>, vector<1x256xf32> -> vector<1x256xf32>
    %14 = arith.addf %12, %13 : vector<1x256xf32>
    %15 = arith.negf %14 : vector<1x256xf32>
    %16 = math.exp %15 : vector<1x256xf32>
    %cst_16 = arith.constant 1.000000e+00 : f32
    %17 = vector.broadcast %cst_16 : f32 to vector<1x256xf32>
    %18 = arith.addf %17, %16 : vector<1x256xf32>
    %19 = arith.divf %17, %18 : vector<1x256xf32>
    %20 = math.tanh %14 : vector<1x256xf32>
    %21 = vector.extract_strided_slice %19 {offsets = [0, 0], sizes = [1, 64], strides = [1, 1]} : vector<1x256xf32> to vector<1x64xf32>
    %22 = vector.extract_strided_slice %19 {offsets = [0, 64], sizes = [1, 64], strides = [1, 1]} : vector<1x256xf32> to vector<1x64xf32>
    %23 = vector.extract_strided_slice %20 {offsets = [0, 128], sizes = [1, 64], strides = [1, 1]} : vector<1x256xf32> to vector<1x64xf32>
    %24 = vector.extract_strided_slice %19 {offsets = [0, 192], sizes = [1, 64], strides = [1, 1]} : vector<1x256xf32> to vector<1x64xf32>
    %25 = arith.mulf %22, %10 : vector<1x64xf32>
    %26 = arith.mulf %21, %23 : vector<1x64xf32>
    %27 = arith.addf %25, %26 : vector<1x64xf32>
    %28 = math.tanh %27 : vector<1x64xf32>
    %29 = arith.mulf %24, %28 : vector<1x64xf32>
    %30 = tpu.concatenate %29, %10 in 1 : vector<1x64xf32>, vector<1x64xf32> -> vector<1x128xf32>
    %cst_17 = arith.constant dense<0.000000e+00> : vector<1x256xf32>
    %31 = tpu.matmul %30, %8, %cst_17 {dimension_numbers = #tpu.dot_dimension_numbers<[1], [0], [0], [1], [0, 0, 1, 1], [], []>} : vector<1x128xf32>, vector<128x256xf32>, vector<1x256xf32> -> vector<1x256xf32>
    %32 = arith.addf %31, %9 : vector<1x256xf32>
    %33 = arith.negf %32 : vector<1x256xf32>
    %34 = math.exp %33 : vector<1x256xf32>
    %cst_18 = arith.constant 1.000000e+00 : f32
    %35 = vector.broadcast %cst_18 : f32 to vector<1x256xf32>
    %36 = arith.addf %35, %34 : vector<1x256xf32>
    %37 = arith.divf %35, %36 : vector<1x256xf32>
    %38 = math.tanh %32 : vector<1x256xf32>
    %39 = vector.extract_strided_slice %37 {offsets = [0, 0], sizes = [1, 64], strides = [1, 1]} : vector<1x256xf32> to vector<1x64xf32>
    %40 = vector.extract_strided_slice %37 {offsets = [0, 64], sizes = [1, 64], strides = [1, 1]} : vector<1x256xf32> to vector<1x64xf32>
    %41 = vector.extract_strided_slice %38 {offsets = [0, 128], sizes = [1, 64], strides = [1, 1]} : vector<1x256xf32> to vector<1x64xf32>
    %42 = vector.extract_strided_slice %37 {offsets = [0, 192], sizes = [1, 64], strides = [1, 1]} : vector<1x256xf32> to vector<1x64xf32>
    %43 = arith.mulf %40, %10 : vector<1x64xf32>
    %44 = arith.mulf %39, %41 : vector<1x64xf32>
    %45 = arith.addf %43, %44 : vector<1x64xf32>
    %46 = math.tanh %45 : vector<1x64xf32>
    %47 = arith.mulf %42, %46 : vector<1x64xf32>
    %c1_i32 = arith.constant 1 : i32
    %48 = arith.index_cast %c1_i32 : i32 to index
    %c0_19 = arith.constant 0 : index
    %49 = vector.load %arg9[%48, %c0_19] : memref<8x256xf32, #tpu.memory_space<vmem>>, vector<1x256xf32>
    %cst_20 = arith.constant dense<0.000000e+00> : vector<1x256xf32>
    %50 = tpu.matmul %29, %7, %cst_20 {dimension_numbers = #tpu.dot_dimension_numbers<[1], [0], [0], [1], [0, 0, 1, 1], [], []>} : vector<1x64xf32>, vector<64x256xf32>, vector<1x256xf32> -> vector<1x256xf32>
    %51 = arith.addf %49, %50 : vector<1x256xf32>
    %52 = arith.negf %51 : vector<1x256xf32>
    %53 = math.exp %52 : vector<1x256xf32>
    %cst_21 = arith.constant 1.000000e+00 : f32
    %54 = vector.broadcast %cst_21 : f32 to vector<1x256xf32>
    %55 = arith.addf %54, %53 : vector<1x256xf32>
    %56 = arith.divf %54, %55 : vector<1x256xf32>
    %57 = math.tanh %51 : vector<1x256xf32>
    %58 = vector.extract_strided_slice %56 {offsets = [0, 0], sizes = [1, 64], strides = [1, 1]} : vector<1x256xf32> to vector<1x64xf32>
    %59 = vector.extract_strided_slice %56 {offsets = [0, 64], sizes = [1, 64], strides = [1, 1]} : vector<1x256xf32> to vector<1x64xf32>
    %60 = vector.extract_strided_slice %57 {offsets = [0, 128], sizes = [1, 64], strides = [1, 1]} : vector<1x256xf32> to vector<1x64xf32>
    %61 = vector.extract_strided_slice %56 {offsets = [0, 192], sizes = [1, 64], strides = [1, 1]} : vector<1x256xf32> to vector<1x64xf32>
    %62 = arith.mulf %59, %27 : vector<1x64xf32>
    %63 = arith.mulf %58, %60 : vector<1x64xf32>
    %64 = arith.addf %62, %63 : vector<1x64xf32>
    %65 = math.tanh %64 : vector<1x64xf32>
    %66 = arith.mulf %61, %65 : vector<1x64xf32>
    %67 = tpu.concatenate %66, %47 in 1 : vector<1x64xf32>, vector<1x64xf32> -> vector<1x128xf32>
    %cst_22 = arith.constant dense<0.000000e+00> : vector<1x256xf32>
    %68 = tpu.matmul %67, %8, %cst_22 {dimension_numbers = #tpu.dot_dimension_numbers<[1], [0], [0], [1], [0, 0, 1, 1], [], []>} : vector<1x128xf32>, vector<128x256xf32>, vector<1x256xf32> -> vector<1x256xf32>
    %69 = arith.addf %68, %9 : vector<1x256xf32>
    %70 = arith.negf %69 : vector<1x256xf32>
    %71 = math.exp %70 : vector<1x256xf32>
    %cst_23 = arith.constant 1.000000e+00 : f32
    %72 = vector.broadcast %cst_23 : f32 to vector<1x256xf32>
    %73 = arith.addf %72, %71 : vector<1x256xf32>
    %74 = arith.divf %72, %73 : vector<1x256xf32>
    %75 = math.tanh %69 : vector<1x256xf32>
    %76 = vector.extract_strided_slice %74 {offsets = [0, 0], sizes = [1, 64], strides = [1, 1]} : vector<1x256xf32> to vector<1x64xf32>
    %77 = vector.extract_strided_slice %74 {offsets = [0, 64], sizes = [1, 64], strides = [1, 1]} : vector<1x256xf32> to vector<1x64xf32>
    %78 = vector.extract_strided_slice %75 {offsets = [0, 128], sizes = [1, 64], strides = [1, 1]} : vector<1x256xf32> to vector<1x64xf32>
    %79 = vector.extract_strided_slice %74 {offsets = [0, 192], sizes = [1, 64], strides = [1, 1]} : vector<1x256xf32> to vector<1x64xf32>
    %80 = arith.mulf %77, %45 : vector<1x64xf32>
    %81 = arith.mulf %76, %78 : vector<1x64xf32>
    %82 = arith.addf %80, %81 : vector<1x64xf32>
    %83 = math.tanh %82 : vector<1x64xf32>
    %84 = arith.mulf %79, %83 : vector<1x64xf32>
    %c2_i32 = arith.constant 2 : i32
    %85 = arith.index_cast %c2_i32 : i32 to index
    %c0_24 = arith.constant 0 : index
    %86 = vector.load %arg9[%85, %c0_24] : memref<8x256xf32, #tpu.memory_space<vmem>>, vector<1x256xf32>
    %cst_25 = arith.constant dense<0.000000e+00> : vector<1x256xf32>
    %87 = tpu.matmul %66, %7, %cst_25 {dimension_numbers = #tpu.dot_dimension_numbers<[1], [0], [0], [1], [0, 0, 1, 1], [], []>} : vector<1x64xf32>, vector<64x256xf32>, vector<1x256xf32> -> vector<1x256xf32>
    %88 = arith.addf %86, %87 : vector<1x256xf32>
    %89 = arith.negf %88 : vector<1x256xf32>
    %90 = math.exp %89 : vector<1x256xf32>
    %cst_26 = arith.constant 1.000000e+00 : f32
    %91 = vector.broadcast %cst_26 : f32 to vector<1x256xf32>
    %92 = arith.addf %91, %90 : vector<1x256xf32>
    %93 = arith.divf %91, %92 : vector<1x256xf32>
    %94 = math.tanh %88 : vector<1x256xf32>
    %95 = vector.extract_strided_slice %93 {offsets = [0, 0], sizes = [1, 64], strides = [1, 1]} : vector<1x256xf32> to vector<1x64xf32>
    %96 = vector.extract_strided_slice %93 {offsets = [0, 64], sizes = [1, 64], strides = [1, 1]} : vector<1x256xf32> to vector<1x64xf32>
    %97 = vector.extract_strided_slice %94 {offsets = [0, 128], sizes = [1, 64], strides = [1, 1]} : vector<1x256xf32> to vector<1x64xf32>
    %98 = vector.extract_strided_slice %93 {offsets = [0, 192], sizes = [1, 64], strides = [1, 1]} : vector<1x256xf32> to vector<1x64xf32>
    %99 = arith.mulf %96, %64 : vector<1x64xf32>
    %100 = arith.mulf %95, %97 : vector<1x64xf32>
    %101 = arith.addf %99, %100 : vector<1x64xf32>
    %102 = math.tanh %101 : vector<1x64xf32>
    %103 = arith.mulf %98, %102 : vector<1x64xf32>
    %104 = tpu.concatenate %103, %84 in 1 : vector<1x64xf32>, vector<1x64xf32> -> vector<1x128xf32>
    %cst_27 = arith.constant dense<0.000000e+00> : vector<1x256xf32>
    %105 = tpu.matmul %104, %8, %cst_27 {dimension_numbers = #tpu.dot_dimension_numbers<[1], [0], [0], [1], [0, 0, 1, 1], [], []>} : vector<1x128xf32>, vector<128x256xf32>, vector<1x256xf32> -> vector<1x256xf32>
    %106 = arith.addf %105, %9 : vector<1x256xf32>
    %107 = arith.negf %106 : vector<1x256xf32>
    %108 = math.exp %107 : vector<1x256xf32>
    %cst_28 = arith.constant 1.000000e+00 : f32
    %109 = vector.broadcast %cst_28 : f32 to vector<1x256xf32>
    %110 = arith.addf %109, %108 : vector<1x256xf32>
    %111 = arith.divf %109, %110 : vector<1x256xf32>
    %112 = math.tanh %106 : vector<1x256xf32>
    %113 = vector.extract_strided_slice %111 {offsets = [0, 0], sizes = [1, 64], strides = [1, 1]} : vector<1x256xf32> to vector<1x64xf32>
    %114 = vector.extract_strided_slice %111 {offsets = [0, 64], sizes = [1, 64], strides = [1, 1]} : vector<1x256xf32> to vector<1x64xf32>
    %115 = vector.extract_strided_slice %112 {offsets = [0, 128], sizes = [1, 64], strides = [1, 1]} : vector<1x256xf32> to vector<1x64xf32>
    %116 = vector.extract_strided_slice %111 {offsets = [0, 192], sizes = [1, 64], strides = [1, 1]} : vector<1x256xf32> to vector<1x64xf32>
    %117 = arith.mulf %114, %82 : vector<1x64xf32>
    %118 = arith.mulf %113, %115 : vector<1x64xf32>
    %119 = arith.addf %117, %118 : vector<1x64xf32>
    %120 = math.tanh %119 : vector<1x64xf32>
    %121 = arith.mulf %116, %120 : vector<1x64xf32>
    %c3_i32 = arith.constant 3 : i32
    %122 = arith.index_cast %c3_i32 : i32 to index
    %c0_29 = arith.constant 0 : index
    %123 = vector.load %arg9[%122, %c0_29] : memref<8x256xf32, #tpu.memory_space<vmem>>, vector<1x256xf32>
    %cst_30 = arith.constant dense<0.000000e+00> : vector<1x256xf32>
    %124 = tpu.matmul %103, %7, %cst_30 {dimension_numbers = #tpu.dot_dimension_numbers<[1], [0], [0], [1], [0, 0, 1, 1], [], []>} : vector<1x64xf32>, vector<64x256xf32>, vector<1x256xf32> -> vector<1x256xf32>
    %125 = arith.addf %123, %124 : vector<1x256xf32>
    %126 = arith.negf %125 : vector<1x256xf32>
    %127 = math.exp %126 : vector<1x256xf32>
    %cst_31 = arith.constant 1.000000e+00 : f32
    %128 = vector.broadcast %cst_31 : f32 to vector<1x256xf32>
    %129 = arith.addf %128, %127 : vector<1x256xf32>
    %130 = arith.divf %128, %129 : vector<1x256xf32>
    %131 = math.tanh %125 : vector<1x256xf32>
    %132 = vector.extract_strided_slice %130 {offsets = [0, 0], sizes = [1, 64], strides = [1, 1]} : vector<1x256xf32> to vector<1x64xf32>
    %133 = vector.extract_strided_slice %130 {offsets = [0, 64], sizes = [1, 64], strides = [1, 1]} : vector<1x256xf32> to vector<1x64xf32>
    %134 = vector.extract_strided_slice %131 {offsets = [0, 128], sizes = [1, 64], strides = [1, 1]} : vector<1x256xf32> to vector<1x64xf32>
    %135 = vector.extract_strided_slice %130 {offsets = [0, 192], sizes = [1, 64], strides = [1, 1]} : vector<1x256xf32> to vector<1x64xf32>
    %136 = arith.mulf %133, %101 : vector<1x64xf32>
    %137 = arith.mulf %132, %134 : vector<1x64xf32>
    %138 = arith.addf %136, %137 : vector<1x64xf32>
    %139 = math.tanh %138 : vector<1x64xf32>
    %140 = arith.mulf %135, %139 : vector<1x64xf32>
    %141 = tpu.concatenate %140, %121 in 1 : vector<1x64xf32>, vector<1x64xf32> -> vector<1x128xf32>
    %cst_32 = arith.constant dense<0.000000e+00> : vector<1x256xf32>
    %142 = tpu.matmul %141, %8, %cst_32 {dimension_numbers = #tpu.dot_dimension_numbers<[1], [0], [0], [1], [0, 0, 1, 1], [], []>} : vector<1x128xf32>, vector<128x256xf32>, vector<1x256xf32> -> vector<1x256xf32>
    %143 = arith.addf %142, %9 : vector<1x256xf32>
    %144 = arith.negf %143 : vector<1x256xf32>
    %145 = math.exp %144 : vector<1x256xf32>
    %cst_33 = arith.constant 1.000000e+00 : f32
    %146 = vector.broadcast %cst_33 : f32 to vector<1x256xf32>
    %147 = arith.addf %146, %145 : vector<1x256xf32>
    %148 = arith.divf %146, %147 : vector<1x256xf32>
    %149 = math.tanh %143 : vector<1x256xf32>
    %150 = vector.extract_strided_slice %148 {offsets = [0, 0], sizes = [1, 64], strides = [1, 1]} : vector<1x256xf32> to vector<1x64xf32>
    %151 = vector.extract_strided_slice %148 {offsets = [0, 64], sizes = [1, 64], strides = [1, 1]} : vector<1x256xf32> to vector<1x64xf32>
    %152 = vector.extract_strided_slice %149 {offsets = [0, 128], sizes = [1, 64], strides = [1, 1]} : vector<1x256xf32> to vector<1x64xf32>
    %153 = vector.extract_strided_slice %148 {offsets = [0, 192], sizes = [1, 64], strides = [1, 1]} : vector<1x256xf32> to vector<1x64xf32>
    %154 = arith.mulf %151, %119 : vector<1x64xf32>
    %155 = arith.mulf %150, %152 : vector<1x64xf32>
    %156 = arith.addf %154, %155 : vector<1x64xf32>
    %157 = math.tanh %156 : vector<1x64xf32>
    %158 = arith.mulf %153, %157 : vector<1x64xf32>
    %c4_i32 = arith.constant 4 : i32
    %159 = arith.index_cast %c4_i32 : i32 to index
    %c0_34 = arith.constant 0 : index
    %160 = vector.load %arg9[%159, %c0_34] : memref<8x256xf32, #tpu.memory_space<vmem>>, vector<1x256xf32>
    %cst_35 = arith.constant dense<0.000000e+00> : vector<1x256xf32>
    %161 = tpu.matmul %140, %7, %cst_35 {dimension_numbers = #tpu.dot_dimension_numbers<[1], [0], [0], [1], [0, 0, 1, 1], [], []>} : vector<1x64xf32>, vector<64x256xf32>, vector<1x256xf32> -> vector<1x256xf32>
    %162 = arith.addf %160, %161 : vector<1x256xf32>
    %163 = arith.negf %162 : vector<1x256xf32>
    %164 = math.exp %163 : vector<1x256xf32>
    %cst_36 = arith.constant 1.000000e+00 : f32
    %165 = vector.broadcast %cst_36 : f32 to vector<1x256xf32>
    %166 = arith.addf %165, %164 : vector<1x256xf32>
    %167 = arith.divf %165, %166 : vector<1x256xf32>
    %168 = math.tanh %162 : vector<1x256xf32>
    %169 = vector.extract_strided_slice %167 {offsets = [0, 0], sizes = [1, 64], strides = [1, 1]} : vector<1x256xf32> to vector<1x64xf32>
    %170 = vector.extract_strided_slice %167 {offsets = [0, 64], sizes = [1, 64], strides = [1, 1]} : vector<1x256xf32> to vector<1x64xf32>
    %171 = vector.extract_strided_slice %168 {offsets = [0, 128], sizes = [1, 64], strides = [1, 1]} : vector<1x256xf32> to vector<1x64xf32>
    %172 = vector.extract_strided_slice %167 {offsets = [0, 192], sizes = [1, 64], strides = [1, 1]} : vector<1x256xf32> to vector<1x64xf32>
    %173 = arith.mulf %170, %138 : vector<1x64xf32>
    %174 = arith.mulf %169, %171 : vector<1x64xf32>
    %175 = arith.addf %173, %174 : vector<1x64xf32>
    %176 = math.tanh %175 : vector<1x64xf32>
    %177 = arith.mulf %172, %176 : vector<1x64xf32>
    %178 = tpu.concatenate %177, %158 in 1 : vector<1x64xf32>, vector<1x64xf32> -> vector<1x128xf32>
    %cst_37 = arith.constant dense<0.000000e+00> : vector<1x256xf32>
    %179 = tpu.matmul %178, %8, %cst_37 {dimension_numbers = #tpu.dot_dimension_numbers<[1], [0], [0], [1], [0, 0, 1, 1], [], []>} : vector<1x128xf32>, vector<128x256xf32>, vector<1x256xf32> -> vector<1x256xf32>
    %180 = arith.addf %179, %9 : vector<1x256xf32>
    %181 = arith.negf %180 : vector<1x256xf32>
    %182 = math.exp %181 : vector<1x256xf32>
    %cst_38 = arith.constant 1.000000e+00 : f32
    %183 = vector.broadcast %cst_38 : f32 to vector<1x256xf32>
    %184 = arith.addf %183, %182 : vector<1x256xf32>
    %185 = arith.divf %183, %184 : vector<1x256xf32>
    %186 = math.tanh %180 : vector<1x256xf32>
    %187 = vector.extract_strided_slice %185 {offsets = [0, 0], sizes = [1, 64], strides = [1, 1]} : vector<1x256xf32> to vector<1x64xf32>
    %188 = vector.extract_strided_slice %185 {offsets = [0, 64], sizes = [1, 64], strides = [1, 1]} : vector<1x256xf32> to vector<1x64xf32>
    %189 = vector.extract_strided_slice %186 {offsets = [0, 128], sizes = [1, 64], strides = [1, 1]} : vector<1x256xf32> to vector<1x64xf32>
    %190 = vector.extract_strided_slice %185 {offsets = [0, 192], sizes = [1, 64], strides = [1, 1]} : vector<1x256xf32> to vector<1x64xf32>
    %191 = arith.mulf %188, %156 : vector<1x64xf32>
    %192 = arith.mulf %187, %189 : vector<1x64xf32>
    %193 = arith.addf %191, %192 : vector<1x64xf32>
    %194 = math.tanh %193 : vector<1x64xf32>
    %195 = arith.mulf %190, %194 : vector<1x64xf32>
    %c5_i32 = arith.constant 5 : i32
    %196 = arith.index_cast %c5_i32 : i32 to index
    %c0_39 = arith.constant 0 : index
    %197 = vector.load %arg9[%196, %c0_39] : memref<8x256xf32, #tpu.memory_space<vmem>>, vector<1x256xf32>
    %cst_40 = arith.constant dense<0.000000e+00> : vector<1x256xf32>
    %198 = tpu.matmul %177, %7, %cst_40 {dimension_numbers = #tpu.dot_dimension_numbers<[1], [0], [0], [1], [0, 0, 1, 1], [], []>} : vector<1x64xf32>, vector<64x256xf32>, vector<1x256xf32> -> vector<1x256xf32>
    %199 = arith.addf %197, %198 : vector<1x256xf32>
    %200 = arith.negf %199 : vector<1x256xf32>
    %201 = math.exp %200 : vector<1x256xf32>
    %cst_41 = arith.constant 1.000000e+00 : f32
    %202 = vector.broadcast %cst_41 : f32 to vector<1x256xf32>
    %203 = arith.addf %202, %201 : vector<1x256xf32>
    %204 = arith.divf %202, %203 : vector<1x256xf32>
    %205 = math.tanh %199 : vector<1x256xf32>
    %206 = vector.extract_strided_slice %204 {offsets = [0, 0], sizes = [1, 64], strides = [1, 1]} : vector<1x256xf32> to vector<1x64xf32>
    %207 = vector.extract_strided_slice %204 {offsets = [0, 64], sizes = [1, 64], strides = [1, 1]} : vector<1x256xf32> to vector<1x64xf32>
    %208 = vector.extract_strided_slice %205 {offsets = [0, 128], sizes = [1, 64], strides = [1, 1]} : vector<1x256xf32> to vector<1x64xf32>
    %209 = vector.extract_strided_slice %204 {offsets = [0, 192], sizes = [1, 64], strides = [1, 1]} : vector<1x256xf32> to vector<1x64xf32>
    %210 = arith.mulf %207, %175 : vector<1x64xf32>
    %211 = arith.mulf %206, %208 : vector<1x64xf32>
    %212 = arith.addf %210, %211 : vector<1x64xf32>
    %213 = math.tanh %212 : vector<1x64xf32>
    %214 = arith.mulf %209, %213 : vector<1x64xf32>
    %215 = tpu.concatenate %214, %195 in 1 : vector<1x64xf32>, vector<1x64xf32> -> vector<1x128xf32>
    %cst_42 = arith.constant dense<0.000000e+00> : vector<1x256xf32>
    %216 = tpu.matmul %215, %8, %cst_42 {dimension_numbers = #tpu.dot_dimension_numbers<[1], [0], [0], [1], [0, 0, 1, 1], [], []>} : vector<1x128xf32>, vector<128x256xf32>, vector<1x256xf32> -> vector<1x256xf32>
    %217 = arith.addf %216, %9 : vector<1x256xf32>
    %218 = arith.negf %217 : vector<1x256xf32>
    %219 = math.exp %218 : vector<1x256xf32>
    %cst_43 = arith.constant 1.000000e+00 : f32
    %220 = vector.broadcast %cst_43 : f32 to vector<1x256xf32>
    %221 = arith.addf %220, %219 : vector<1x256xf32>
    %222 = arith.divf %220, %221 : vector<1x256xf32>
    %223 = math.tanh %217 : vector<1x256xf32>
    %224 = vector.extract_strided_slice %222 {offsets = [0, 0], sizes = [1, 64], strides = [1, 1]} : vector<1x256xf32> to vector<1x64xf32>
    %225 = vector.extract_strided_slice %222 {offsets = [0, 64], sizes = [1, 64], strides = [1, 1]} : vector<1x256xf32> to vector<1x64xf32>
    %226 = vector.extract_strided_slice %223 {offsets = [0, 128], sizes = [1, 64], strides = [1, 1]} : vector<1x256xf32> to vector<1x64xf32>
    %227 = vector.extract_strided_slice %222 {offsets = [0, 192], sizes = [1, 64], strides = [1, 1]} : vector<1x256xf32> to vector<1x64xf32>
    %228 = arith.mulf %225, %193 : vector<1x64xf32>
    %229 = arith.mulf %224, %226 : vector<1x64xf32>
    %230 = arith.addf %228, %229 : vector<1x64xf32>
    %231 = math.tanh %230 : vector<1x64xf32>
    %232 = arith.mulf %227, %231 : vector<1x64xf32>
    %c6_i32 = arith.constant 6 : i32
    %233 = arith.index_cast %c6_i32 : i32 to index
    %c0_44 = arith.constant 0 : index
    %234 = vector.load %arg9[%233, %c0_44] : memref<8x256xf32, #tpu.memory_space<vmem>>, vector<1x256xf32>
    %cst_45 = arith.constant dense<0.000000e+00> : vector<1x256xf32>
    %235 = tpu.matmul %214, %7, %cst_45 {dimension_numbers = #tpu.dot_dimension_numbers<[1], [0], [0], [1], [0, 0, 1, 1], [], []>} : vector<1x64xf32>, vector<64x256xf32>, vector<1x256xf32> -> vector<1x256xf32>
    %236 = arith.addf %234, %235 : vector<1x256xf32>
    %237 = arith.negf %236 : vector<1x256xf32>
    %238 = math.exp %237 : vector<1x256xf32>
    %cst_46 = arith.constant 1.000000e+00 : f32
    %239 = vector.broadcast %cst_46 : f32 to vector<1x256xf32>
    %240 = arith.addf %239, %238 : vector<1x256xf32>
    %241 = arith.divf %239, %240 : vector<1x256xf32>
    %242 = math.tanh %236 : vector<1x256xf32>
    %243 = vector.extract_strided_slice %241 {offsets = [0, 0], sizes = [1, 64], strides = [1, 1]} : vector<1x256xf32> to vector<1x64xf32>
    %244 = vector.extract_strided_slice %241 {offsets = [0, 64], sizes = [1, 64], strides = [1, 1]} : vector<1x256xf32> to vector<1x64xf32>
    %245 = vector.extract_strided_slice %242 {offsets = [0, 128], sizes = [1, 64], strides = [1, 1]} : vector<1x256xf32> to vector<1x64xf32>
    %246 = vector.extract_strided_slice %241 {offsets = [0, 192], sizes = [1, 64], strides = [1, 1]} : vector<1x256xf32> to vector<1x64xf32>
    %247 = arith.mulf %244, %212 : vector<1x64xf32>
    %248 = arith.mulf %243, %245 : vector<1x64xf32>
    %249 = arith.addf %247, %248 : vector<1x64xf32>
    %250 = math.tanh %249 : vector<1x64xf32>
    %251 = arith.mulf %246, %250 : vector<1x64xf32>
    %252 = tpu.concatenate %251, %232 in 1 : vector<1x64xf32>, vector<1x64xf32> -> vector<1x128xf32>
    %cst_47 = arith.constant dense<0.000000e+00> : vector<1x256xf32>
    %253 = tpu.matmul %252, %8, %cst_47 {dimension_numbers = #tpu.dot_dimension_numbers<[1], [0], [0], [1], [0, 0, 1, 1], [], []>} : vector<1x128xf32>, vector<128x256xf32>, vector<1x256xf32> -> vector<1x256xf32>
    %254 = arith.addf %253, %9 : vector<1x256xf32>
    %255 = arith.negf %254 : vector<1x256xf32>
    %256 = math.exp %255 : vector<1x256xf32>
    %cst_48 = arith.constant 1.000000e+00 : f32
    %257 = vector.broadcast %cst_48 : f32 to vector<1x256xf32>
    %258 = arith.addf %257, %256 : vector<1x256xf32>
    %259 = arith.divf %257, %258 : vector<1x256xf32>
    %260 = math.tanh %254 : vector<1x256xf32>
    %261 = vector.extract_strided_slice %259 {offsets = [0, 0], sizes = [1, 64], strides = [1, 1]} : vector<1x256xf32> to vector<1x64xf32>
    %262 = vector.extract_strided_slice %259 {offsets = [0, 64], sizes = [1, 64], strides = [1, 1]} : vector<1x256xf32> to vector<1x64xf32>
    %263 = vector.extract_strided_slice %260 {offsets = [0, 128], sizes = [1, 64], strides = [1, 1]} : vector<1x256xf32> to vector<1x64xf32>
    %264 = vector.extract_strided_slice %259 {offsets = [0, 192], sizes = [1, 64], strides = [1, 1]} : vector<1x256xf32> to vector<1x64xf32>
    %265 = arith.mulf %262, %230 : vector<1x64xf32>
    %266 = arith.mulf %261, %263 : vector<1x64xf32>
    %267 = arith.addf %265, %266 : vector<1x64xf32>
    %268 = math.tanh %267 : vector<1x64xf32>
    %269 = arith.mulf %264, %268 : vector<1x64xf32>
    %c7_i32 = arith.constant 7 : i32
    %270 = arith.index_cast %c7_i32 : i32 to index
    %c0_49 = arith.constant 0 : index
    %271 = vector.load %arg9[%270, %c0_49] : memref<8x256xf32, #tpu.memory_space<vmem>>, vector<1x256xf32>
    %cst_50 = arith.constant dense<0.000000e+00> : vector<1x256xf32>
    %272 = tpu.matmul %251, %7, %cst_50 {dimension_numbers = #tpu.dot_dimension_numbers<[1], [0], [0], [1], [0, 0, 1, 1], [], []>} : vector<1x64xf32>, vector<64x256xf32>, vector<1x256xf32> -> vector<1x256xf32>
    %273 = arith.addf %271, %272 : vector<1x256xf32>
    %274 = arith.negf %273 : vector<1x256xf32>
    %275 = math.exp %274 : vector<1x256xf32>
    %cst_51 = arith.constant 1.000000e+00 : f32
    %276 = vector.broadcast %cst_51 : f32 to vector<1x256xf32>
    %277 = arith.addf %276, %275 : vector<1x256xf32>
    %278 = arith.divf %276, %277 : vector<1x256xf32>
    %279 = math.tanh %273 : vector<1x256xf32>
    %280 = vector.extract_strided_slice %278 {offsets = [0, 0], sizes = [1, 64], strides = [1, 1]} : vector<1x256xf32> to vector<1x64xf32>
    %281 = vector.extract_strided_slice %278 {offsets = [0, 64], sizes = [1, 64], strides = [1, 1]} : vector<1x256xf32> to vector<1x64xf32>
    %282 = vector.extract_strided_slice %279 {offsets = [0, 128], sizes = [1, 64], strides = [1, 1]} : vector<1x256xf32> to vector<1x64xf32>
    %283 = vector.extract_strided_slice %278 {offsets = [0, 192], sizes = [1, 64], strides = [1, 1]} : vector<1x256xf32> to vector<1x64xf32>
    %284 = arith.mulf %281, %249 : vector<1x64xf32>
    %285 = arith.mulf %280, %282 : vector<1x64xf32>
    %286 = arith.addf %284, %285 : vector<1x64xf32>
    %287 = math.tanh %286 : vector<1x64xf32>
    %288 = arith.mulf %283, %287 : vector<1x64xf32>
    %289 = tpu.concatenate %288, %269 in 1 : vector<1x64xf32>, vector<1x64xf32> -> vector<1x128xf32>
    %cst_52 = arith.constant dense<0.000000e+00> : vector<1x256xf32>
    %290 = tpu.matmul %289, %8, %cst_52 {dimension_numbers = #tpu.dot_dimension_numbers<[1], [0], [0], [1], [0, 0, 1, 1], [], []>} : vector<1x128xf32>, vector<128x256xf32>, vector<1x256xf32> -> vector<1x256xf32>
    %291 = arith.addf %290, %9 : vector<1x256xf32>
    %292 = arith.negf %291 : vector<1x256xf32>
    %293 = math.exp %292 : vector<1x256xf32>
    %cst_53 = arith.constant 1.000000e+00 : f32
    %294 = vector.broadcast %cst_53 : f32 to vector<1x256xf32>
    %295 = arith.addf %294, %293 : vector<1x256xf32>
    %296 = arith.divf %294, %295 : vector<1x256xf32>
    %297 = math.tanh %291 : vector<1x256xf32>
    %298 = vector.extract_strided_slice %296 {offsets = [0, 0], sizes = [1, 64], strides = [1, 1]} : vector<1x256xf32> to vector<1x64xf32>
    %299 = vector.extract_strided_slice %296 {offsets = [0, 64], sizes = [1, 64], strides = [1, 1]} : vector<1x256xf32> to vector<1x64xf32>
    %300 = vector.extract_strided_slice %297 {offsets = [0, 128], sizes = [1, 64], strides = [1, 1]} : vector<1x256xf32> to vector<1x64xf32>
    %301 = vector.extract_strided_slice %296 {offsets = [0, 192], sizes = [1, 64], strides = [1, 1]} : vector<1x256xf32> to vector<1x64xf32>
    %302 = arith.mulf %299, %267 : vector<1x64xf32>
    %303 = arith.mulf %298, %300 : vector<1x64xf32>
    %304 = arith.addf %302, %303 : vector<1x64xf32>
    %305 = math.tanh %304 : vector<1x64xf32>
    %306 = arith.mulf %301, %305 : vector<1x64xf32>
    %c8_i32 = arith.constant 8 : i32
    %c0_54 = arith.constant 0 : index
    %c0_55 = arith.constant 0 : index
    %307 = vector.load %arg6[%c0_54, %c0_55] : memref<64x1xf32, #tpu.memory_space<vmem>>, vector<64x1xf32>
    %cst_56 = arith.constant dense<0.000000e+00> : vector<1x1xf32>
    %308 = tpu.matmul %306, %307, %cst_56 {dimension_numbers = #tpu.dot_dimension_numbers<[1], [0], [0], [1], [0, 0, 1, 1], [], []>} : vector<1x64xf32>, vector<64x1xf32>, vector<1x1xf32> -> vector<1x1xf32>
    %c0_57 = arith.constant 0 : index
    %c0_58 = arith.constant 0 : index
    %309 = vector.load %arg7[%c0_57, %c0_58] : memref<1x1xf32, #tpu.memory_space<vmem>>, vector<1x1xf32>
    %310 = arith.addf %308, %309 : vector<1x1xf32>
    %c0_59 = arith.constant 0 : index
    %c0_60 = arith.constant 0 : index
    %311 = vector.load %arg8[%c0_59, %c0_60] : memref<1x1xf32, #tpu.memory_space<vmem>>, vector<1x1xf32>
    tpu.vector_store %arg8[%c0_59, %c0_60], %310 {strides = array<i32>} : memref<1x1xf32, #tpu.memory_space<vmem>>, vector<1x1xf32>,
    return
  }
}

</mosaic_0001>

<llo_original>
// kernel: tpu_custom_call.1
$region0: #{tpu_custom_call.1}
  #allocation0 [shape = 'u32[]', space=smem, size = 0x4, offset = 0x4, fixed_abs, tag = 'smem constant byte address 0x4 - core index']
  #allocation1 [shape = 'u32[144,128]{1,0:T(1,128)}', space=vmem, size = 0x12000, scoped, tag = 'internal scratch']
  #allocation2 [shape = 'f32[8,256]{1,0:T(8,128)}', space=vmem, size = 0x2000, scoped, tag = 'scratch operand']
  #allocation3 [shape = 'f32[1,1]{1,0:T(1,128)S(1)}', space=vmem, size = 0x200, scoped, tag = 'scoped memory for tpu_custom_call.1']
  %s0 = inlined_call_operand.vmem [shape: f32[8,1], index: 0, kind: input, shape index: {}]
  %s1 = inlined_call_operand.vmem [shape: f32[1,256], index: 1, kind: input, shape index: {}]
  %s2 = inlined_call_operand.hbm [shape: f32[64,256], index: 2, kind: input, shape index: {}]
  %s3 = inlined_call_operand.vmem [shape: f32[1,256], index: 3, kind: input, shape index: {}]
  %s4 = inlined_call_operand.hbm [shape: f32[128,256], index: 4, kind: input, shape index: {}]
  %s5 = inlined_call_operand.vmem [shape: f32[1,256], index: 5, kind: input, shape index: {}]
  %s6 = inlined_call_operand.vmem [shape: f32[64,1], index: 6, kind: input, shape index: {}]
  %s7 = inlined_call_operand.<no memory space> [shape: f32[1,1], index: 7, kind: input, shape index: {}]
  %s8 = inlined_call_operand.hbm [shape: f32[1,1], index: 8, kind: output, shape index: {}]
  %s9 = sld [smem:[#allocation0]]
  $region50: #{tpu_custom_call.1} parent=0
    _
  %s11 = ssub.s32 1, %s9
  %s12 = scalar_select 0, %s11, %s9
  %v13 = vstv %s7
  %14 = vst [vmem:[#allocation3] sm:$0x1] %v13
  $region1: #{tpu_custom_call.1} parent=0
    #allocation4 [shape = 'u8[65536]{0}', space=vmem, size = 0x10000, scoped, tag = 'input window, operand 2, single buffered']
    #allocation5 [shape = 's32[1]{0}', space=sflag, size = 0x4, scoped, tag = 'scoped memory for tpu_custom_call.1']
    #allocation6 [shape = 's32[1]{0}', space=sflag, size = 0x4, scoped, tag = 'scoped memory for tpu_custom_call.1']
    #allocation7 [shape = 'u8[131072]{0}', space=vmem, size = 0x20000, scoped, tag = 'input window, operand 4, single buffered']
    #allocation8 [shape = 's32[1]{0}', space=sflag, size = 0x4, scoped, tag = 'scoped memory for tpu_custom_call.1']
    #allocation9 [shape = 'u8[512]{0}', space=vmem, size = 0x400, scoped, tag = 'output window, operand 0, single buffered']
    %15 = vsyncpa [#allocation5], 0
    %16 = vsyncpa [#allocation8], 0
    %17 = vsyncpa [#allocation6], 0
    // Predicated region
    $region2: #{tpu_custom_call.1} parent=1 // pred_check
      _
    $region3: #{tpu_custom_call.1} parent=1 // pred_check_branch
      %19 = sbr.rel (0) target = $region5
    $region4: #{tpu_custom_call.1} parent=1 // pred_region
      _
    $region5: #{tpu_custom_call.1} parent=1 // pred_fallthru
      _
    // Predicated region
    $region6: #{tpu_custom_call.1} parent=1 // pred_check
      _
    $region7: #{tpu_custom_call.1} parent=1 // pred_check_branch
      %21 = sbr.rel (0) target = $region9
    $region8: #{tpu_custom_call.1} parent=1 // pred_region
      _
    $region9: #{tpu_custom_call.1} parent=1 // pred_fallthru
      _
    // Predicated region
    $region10: #{tpu_custom_call.1} parent=1 // pred_check
      _
    $region11: #{tpu_custom_call.1} parent=1 // pred_check_branch
      %23 = sbr.rel (0) target = $region13
    $region12: #{tpu_custom_call.1} parent=1 // pred_region
      %s25 = ssub.s32 2048, 2048
      %26 = vsyncadd [#allocation5], %s25
      %s27 = sshll.u32 [#allocation4], 4
      %s28 = int_to_ptr.vmem [resolvable:$true] %s27
      %33 = dma.hbm_to_vmem [thread:$0]  %s2, 2048, %s28, [#allocation5], 256, 256, 16
    $region13: #{tpu_custom_call.1} parent=1 // pred_fallthru
      _
    // Predicated region
    $region14: #{tpu_custom_call.1} parent=1 // pred_check
      _
    $region15: #{tpu_custom_call.1} parent=1 // pred_check_branch
      %35 = sbr.rel (0) target = $region17
    $region16: #{tpu_custom_call.1} parent=1 // pred_region
      _
    $region17: #{tpu_custom_call.1} parent=1 // pred_fallthru
      _
    // Predicated region
    $region18: #{tpu_custom_call.1} parent=1 // pred_check
      _
    $region19: #{tpu_custom_call.1} parent=1 // pred_check_branch
      %37 = sbr.rel (0) target = $region21
    $region20: #{tpu_custom_call.1} parent=1 // pred_region
      %s39 = ssub.s32 4096, 4096
      %40 = vsyncadd [#allocation8], %s39
      %s41 = sshll.u32 [#allocation7], 4
      %s42 = int_to_ptr.vmem [resolvable:$true] %s41
      %47 = dma.hbm_to_vmem [thread:$0]  %s4, 4096, %s42, [#allocation8], 256, 256, 16
    $region21: #{tpu_custom_call.1} parent=1 // pred_fallthru
      _
    // Predicated region
    $region22: #{tpu_custom_call.1} parent=1 // pred_check
      _
    $region23: #{tpu_custom_call.1} parent=1 // pred_check_branch
      %49 = sbr.rel (0) target = $region25
    $region24: #{tpu_custom_call.1} parent=1 // pred_region
      _
    $region25: #{tpu_custom_call.1} parent=1 // pred_fallthru
      _
    // Predicated region
    $region26: #{tpu_custom_call.1} parent=1 // pred_check
      _
    $region27: #{tpu_custom_call.1} parent=1 // pred_check_branch
      %51 = sbr.rel (0) target = $region29
    $region28: #{tpu_custom_call.1} parent=1 // pred_region
      _
    $region29: #{tpu_custom_call.1} parent=1 // pred_fallthru
      _
    // Predicated region
    $region30: #{tpu_custom_call.1} parent=1 // pred_check
      _
    $region31: #{tpu_custom_call.1} parent=1 // pred_check_branch
      %53 = sbr.rel (0) target = $region33
    $region32: #{tpu_custom_call.1} parent=1 // pred_region
      _
    $region33: #{tpu_custom_call.1} parent=1 // pred_fallthru
      _
    // Predicated region
    $region34: #{tpu_custom_call.1} parent=1 // pred_check
      _
    $region35: #{tpu_custom_call.1} parent=1 // pred_check_branch
      %55 = sbr.rel (0) target = $region37
    $region36: #{tpu_custom_call.1} parent=1 // pred_region
      %56 = dma.done [#allocation5], 2048
    $region37: #{tpu_custom_call.1} parent=1 // pred_fallthru
      _
    // Predicated region
    $region38: #{tpu_custom_call.1} parent=1 // pred_check
      _
    $region39: #{tpu_custom_call.1} parent=1 // pred_check_branch
      %58 = sbr.rel (0) target = $region41
    $region40: #{tpu_custom_call.1} parent=1 // pred_region
      %59 = dma.done [#allocation8], 4096
    $region41: #{tpu_custom_call.1} parent=1 // pred_fallthru
      _
    %v60 = vld [vmem:[%s0] sm:$0xff]
    %v61 = vld [vmem:[%s1] sm:$0x3]
    %v62 = vld [vmem:[%s3] sm:$0x3]
    %v64 = vlaneseq
    %v65 = vshrl.u32 %v64, 7
    %v66 = vsub.s32 0, %v65
    %v67 = vrot.slane %v62, %v66
    %v68 = vlaneseq
    %v69 = vshrl.u32 %v68, 7
    %v70 = vsub.s32 1, %v69
    %v71 = vrot.slane %v62, %v70
    %v75 = vlaneseq
    %v76 = vshrl.u32 %v75, 7
    %v77 = vsub.s32 0, %v76
    %v78 = vrot.slane %v61, %v77
    %v79 = vlaneseq
    %v80 = vshrl.u32 %v79, 7
    %v81 = vsub.s32 1, %v80
    %v82 = vrot.slane %v61, %v81
    %vm83 = vcmask 7168
    %v85 = vsel %vm83, %v60, 0
    %vm87 = vcmask 1040384
    %v88 = vsel %vm87, %v78, 0
    %v90 = vsel %vm87, %v82, 0
    %92 = vmatprep.subr.mxu0 %v90
    %93 = vmatpush1.msra.mxu0 %v88
    %94 = vmatprep.subr.mxu0 0.0
    %95 = vmatpush1.msra.mxu0 0.0
    %96 = vmatprep.subr.mxu0 0.0
    %97 = vmatpush1.msra.mxu0 0.0
    %98 = vmatprep.subr.mxu0 0.0
    %99 = vmatpush1.msra.mxu0 0.0
    %100 = vmatprep.subr.mxu0 0.0
    %101 = vmatpush1.msra.mxu0 0.0
    %102 = vmatprep.subr.mxu0 0.0
    %103 = vmatpush1.msra.mxu0 0.0
    %104 = vmatprep.subr.mxu0 0.0
    %105 = vmatpush1.msra.mxu0 0.0
    %106 = vmatprep.subr.mxu0 0.0
    %107 = vmatpush1.msra.mxu0 0.0
    %108 = vmatprep.subr.mxu0 0.0
    %109 = vmatpush1.msra.mxu0 0.0
    %110 = vmatprep.subr.mxu0 0.0
    %111 = vmatpush1.msra.mxu0 0.0
    %112 = vmatprep.subr.mxu0 0.0
    %113 = vmatpush1.msra.mxu0 0.0
    %114 = vmatprep.subr.mxu0 0.0
    %115 = vmatpush1.msra.mxu0 0.0
    %116 = vmatprep.subr.mxu0 0.0
    %117 = vmatpush1.msra.mxu0 0.0
    %118 = vmatprep.subr.mxu0 0.0
    %119 = vmatpush1.msra.mxu0 0.0
    %120 = vmatprep.subr.mxu0 0.0
    %121 = vmatpush1.msra.mxu0 0.0
    %122 = vmatprep.subr.mxu0 0.0
    %123 = vmatpush1.msra.mxu0 0.0
    %124 = vmatprep.subr.mxu0 0.0
    %125 = vmatpush1.msra.mxu0 0.0
    %126 = vmatprep.subr.mxu0 0.0
    %127 = vmatpush1.msra.mxu0 0.0
    %128 = vmatprep.subr.mxu0 0.0
    %129 = vmatpush1.msra.mxu0 0.0
    %130 = vmatprep.subr.mxu0 0.0
    %131 = vmatpush1.msra.mxu0 0.0
    %132 = vmatprep.subr.mxu0 0.0
    %133 = vmatpush1.msra.mxu0 0.0
    %134 = vmatprep.subr.mxu0 0.0
    %135 = vmatpush1.msra.mxu0 0.0
    %136 = vmatprep.subr.mxu0 0.0
    %137 = vmatpush1.msra.mxu0 0.0
    %138 = vmatprep.subr.mxu0 0.0
    %139 = vmatpush1.msra.mxu0 0.0
    %140 = vmatprep.subr.mxu0 0.0
    %141 = vmatpush1.msra.mxu0 0.0
    %142 = vmatprep.subr.mxu0 0.0
    %143 = vmatpush1.msra.mxu0 0.0
    %144 = vmatprep.subr.mxu0 0.0
    %145 = vmatpush1.msra.mxu0 0.0
    %146 = vmatprep.subr.mxu0 0.0
    %147 = vmatpush1.msra.mxu0 0.0
    %148 = vmatprep.subr.mxu0 0.0
    %149 = vmatpush1.msra.mxu0 0.0
    %150 = vmatprep.subr.mxu0 0.0
    %151 = vmatpush1.msra.mxu0 0.0
    %152 = vmatprep.subr.mxu0 0.0
    %153 = vmatpush1.msra.mxu0 0.0
    %154 = vmatprep.subr.mxu0 0.0
    %155 = vmatpush1.msra.mxu0 0.0
    %156 = vmatprep.mubr.f32.mxu0 0.0
    %157 = vmatmul.mubr.f32.gmra.mrb[0].mxu0 %v85
    %v158 = vpop.f32.mrb[0].mxu0
    %v159 = vadd.f32 %v67, %v158
    %v160 = vpop.f32.mrb[0].mxu0
    %v161 = vadd.f32 %v71, %v160
    %162 = vdwg.mxu0
    %163 = vst [vmem:[#allocation2] sm:$0xff] %v159
    %164 = vst [vmem:[#allocation2 + $0x8] sm:$0xff] %v161
    %v165 = vld [vmem:[#allocation4] sm:$0xff]
    %v166 = vld [vmem:[#allocation4 + $0x8] sm:$0xff]
    %v167 = vld [vmem:[#allocation4 + $0x10] sm:$0xff]
    %v168 = vld [vmem:[#allocation4 + $0x18] sm:$0xff]
    %v169 = vld [vmem:[#allocation4 + $0x20] sm:$0xff]
    %v170 = vld [vmem:[#allocation4 + $0x28] sm:$0xff]
    %v171 = vld [vmem:[#allocation4 + $0x30] sm:$0xff]
    %v172 = vld [vmem:[#allocation4 + $0x38] sm:$0xff]
    %v173 = vld [vmem:[#allocation4 + $0x40] sm:$0xff]
    %v174 = vld [vmem:[#allocation4 + $0x48] sm:$0xff]
    %v175 = vld [vmem:[#allocation4 + $0x50] sm:$0xff]
    %v176 = vld [vmem:[#allocation4 + $0x58] sm:$0xff]
    %v177 = vld [vmem:[#allocation4 + $0x60] sm:$0xff]
    %v178 = vld [vmem:[#allocation4 + $0x68] sm:$0xff]
    %v179 = vld [vmem:[#allocation4 + $0x70] sm:$0xff]
    %v180 = vld [vmem:[#allocation4 + $0x78] sm:$0xff]
    %v181 = vld [vmem:[#allocation7] sm:$0xff]
    %v182 = vld [vmem:[#allocation7 + $0x8] sm:$0xff]
    %v183 = vld [vmem:[#allocation7 + $0x10] sm:$0xff]
    %v184 = vld [vmem:[#allocation7 + $0x18] sm:$0xff]
    %v185 = vld [vmem:[#allocation7 + $0x20] sm:$0xff]
    %v186 = vld [vmem:[#allocation7 + $0x28] sm:$0xff]
    %v187 = vld [vmem:[#allocation7 + $0x30] sm:$0xff]
    %v188 = vld [vmem:[#allocation7 + $0x38] sm:$0xff]
    %v189 = vld [vmem:[#allocation7 + $0x40] sm:$0xff]
    %v190 = vld [vmem:[#allocation7 + $0x48] sm:$0xff]
    %v191 = vld [vmem:[#allocation7 + $0x50] sm:$0xff]
    %v192 = vld [vmem:[#allocation7 + $0x58] sm:$0xff]
    %v193 = vld [vmem:[#allocation7 + $0x60] sm:$0xff]
    %v194 = vld [vmem:[#allocation7 + $0x68] sm:$0xff]
    %v195 = vld [vmem:[#allocation7 + $0x70] sm:$0xff]
    %v196 = vld [vmem:[#allocation7 + $0x78] sm:$0xff]
    %v197 = vld [vmem:[#allocation7 + $0x80] sm:$0xff]
    %v198 = vld [vmem:[#allocation7 + $0x88] sm:$0xff]
    %v199 = vld [vmem:[#allocation7 + $0x90] sm:$0xff]
    %v200 = vld [vmem:[#allocation7 + $0x98] sm:$0xff]
    %v201 = vld [vmem:[#allocation7 + $0xa0] sm:$0xff]
    %v202 = vld [vmem:[#allocation7 + $0xa8] sm:$0xff]
    %v203 = vld [vmem:[#allocation7 + $0xb0] sm:$0xff]
    %v204 = vld [vmem:[#allocation7 + $0xb8] sm:$0xff]
    %v205 = vld [vmem:[#allocation7 + $0xc0] sm:$0xff]
    %v206 = vld [vmem:[#allocation7 + $0xc8] sm:$0xff]
    %v207 = vld [vmem:[#allocation7 + $0xd0] sm:$0xff]
    %v208 = vld [vmem:[#allocation7 + $0xd8] sm:$0xff]
    %v209 = vld [vmem:[#allocation7 + $0xe0] sm:$0xff]
    %v210 = vld [vmem:[#allocation7 + $0xe8] sm:$0xff]
    %v211 = vld [vmem:[#allocation7 + $0xf0] sm:$0xff]
    %v212 = vld [vmem:[#allocation7 + $0xf8] sm:$0xff]
    %v213 = vld [vmem:[%s5] sm:$0x3]
    %v214 = vld [vmem:[#allocation2] ss:$8 sm:$0x3]
    %vm215 = vcmask 523264
    %v217 = vsel %vm215, 0.0, 0
    %219 = vmatprep.subr.mxu0 %v166
    %220 = vmatpush1.msra.mxu0 %v165
    %221 = vmatprep.subr.mxu0 %v168
    %222 = vmatpush1.msra.mxu0 %v167
    %223 = vmatprep.subr.mxu0 %v170
    %224 = vmatpush1.msra.mxu0 %v169
    %225 = vmatprep.subr.mxu0 %v172
    %226 = vmatpush1.msra.mxu0 %v171
    %227 = vmatprep.subr.mxu0 %v174
    %228 = vmatpush1.msra.mxu0 %v173
    %229 = vmatprep.subr.mxu0 %v176
    %230 = vmatpush1.msra.mxu0 %v175
    %231 = vmatprep.subr.mxu0 %v178
    %232 = vmatpush1.msra.mxu0 %v177
    %233 = vmatprep.subr.mxu0 %v180
    %234 = vmatpush1.msra.mxu0 %v179
    %235 = vmatprep.subr.mxu0 0.0
    %236 = vmatpush1.msra.mxu0 0.0
    %237 = vmatprep.subr.mxu0 0.0
    %238 = vmatpush1.msra.mxu0 0.0
    %239 = vmatprep.subr.mxu0 0.0
    %240 = vmatpush1.msra.mxu0 0.0
    %241 = vmatprep.subr.mxu0 0.0
    %242 = vmatpush1.msra.mxu0 0.0
    %243 = vmatprep.subr.mxu0 0.0
    %244 = vmatpush1.msra.mxu0 0.0
    %245 = vmatprep.subr.mxu0 0.0
    %246 = vmatpush1.msra.mxu0 0.0
    %247 = vmatprep.subr.mxu0 0.0
    %248 = vmatpush1.msra.mxu0 0.0
    %249 = vmatprep.subr.mxu0 0.0
    %250 = vmatpush1.msra.mxu0 0.0
    %251 = vmatprep.subr.mxu0 0.0
    %252 = vmatpush1.msra.mxu0 0.0
    %253 = vmatprep.subr.mxu0 0.0
    %254 = vmatpush1.msra.mxu0 0.0
    %255 = vmatprep.subr.mxu0 0.0
    %256 = vmatpush1.msra.mxu0 0.0
    %257 = vmatprep.subr.mxu0 0.0
    %258 = vmatpush1.msra.mxu0 0.0
    %259 = vmatprep.subr.mxu0 0.0
    %260 = vmatpush1.msra.mxu0 0.0
    %261 = vmatprep.subr.mxu0 0.0
    %262 = vmatpush1.msra.mxu0 0.0
    %263 = vmatprep.subr.mxu0 0.0
    %264 = vmatpush1.msra.mxu0 0.0
    %265 = vmatprep.subr.mxu0 0.0
    %266 = vmatpush1.msra.mxu0 0.0
    %267 = vmatprep.subr.mxu0 0.0
    %268 = vmatpush1.msra.mxu0 0.0
    %269 = vmatprep.subr.mxu0 0.0
    %270 = vmatpush1.msra.mxu0 0.0
    %271 = vmatprep.subr.mxu0 0.0
    %272 = vmatpush1.msra.mxu0 0.0
    %273 = vmatprep.subr.mxu0 0.0
    %274 = vmatpush1.msra.mxu0 0.0
    %275 = vmatprep.subr.mxu0 0.0
    %276 = vmatpush1.msra.mxu0 0.0
    %277 = vmatprep.subr.mxu0 0.0
    %278 = vmatpush1.msra.mxu0 0.0
    %279 = vmatprep.subr.mxu0 0.0
    %280 = vmatpush1.msra.mxu0 0.0
    %281 = vmatprep.subr.mxu0 0.0
    %282 = vmatpush1.msra.mxu0 0.0
    %283 = vmatprep.mubr.f32.mxu0 0.0
    %284 = vmatmul.mubr.f32.gmra.mrb[0].mxu0 %v217
    %v285 = vpop.f32.mrb[0].mxu0
    %v286 = vadd.f32 0.0, %v285
    %v287 = vpop.f32.mrb[0].mxu0
    %v288 = vadd.f32 0.0, %v287
    %289 = vdwg.mxu0
    %v292 = vcombine.low %v286, %v288
    %v294 = vunpack.c.l.s4 1966171168
    %v295 = vunpack.c.0.s8 %v294
    %v296 = vlaneseq
    %v297 = vshrl.u32 %v296, 7
    %v298 = vsub.s32 %v295, %v297
    %v299 = vrot.slane %v292, %v298
    %v301 = vunpack.c.l.s4 1966171168
    %v302 = vunpack.c.0.s8 %v301
    %v303 = vlaneseq
    %v304 = vshrl.u32 %v303, 7
    %v305 = vsub.s32 %v302, %v304
    %v306 = vrot.slane %v299, %v305
    %v308 = vadd.f32 %v214, %v306
    %v309 = vxor.u32 %v308, 2147483648
    %v310 = vmul.f32 %v309, 1.442695
    %v311 = vpow.pop %v310
    %v312 = vadd.f32 %v311, 1.0
    %v313 = vrcp.pop %v312
    %v314 = vmul.f32 1.0, %v313
    %v315 = vtanh.pop %v308
    %v316 = vmul.f32 %v314, 0.0
    %v318 = vrot.slane %v315, 1
    %v320 = vmul.f32 %v314, %v318
    %322 = vrot.lane.b32.xlu0 %v320, 64
    %v323 = vpop.permute.xlu0 %322
    %v325 = vadd.f32 %v316, %v323
    %v326 = vtanh.pop %v325
    %328 = vrot.lane.b32.xlu0 %v314, 64
    %v329 = vpop.permute.xlu0 %328
    %v330 = vrot.slane %v329, 1
    %333 = vrot.lane.b32.xlu0 %v326, 64
    %v334 = vpop.permute.xlu0 %333
    %v336 = vmul.f32 %v330, %v334
    %v337 = vsel %vm215, %v336, 0.0
    %v339 = vlaneseq
    %v340 = vshrl.u32 %v339, 7
    %v341 = vsub.s32 0, %v340
    %v342 = vrot.slane %v213, %v341
    %v343 = vlaneseq
    %v344 = vshrl.u32 %v343, 7
    %v345 = vsub.s32 1, %v344
    %v346 = vrot.slane %v213, %v345
    %349 = vmatprep.subr.mxu0 %v182
    %350 = vmatpush1.msra.mxu0 %v181
    %351 = vmatprep.subr.mxu0 %v184
    %352 = vmatpush1.msra.mxu0 %v183
    %353 = vmatprep.subr.mxu0 %v186
    %354 = vmatpush1.msra.mxu0 %v185
    %355 = vmatprep.subr.mxu0 %v188
    %356 = vmatpush1.msra.mxu0 %v187
    %357 = vmatprep.subr.mxu0 %v190
    %358 = vmatpush1.msra.mxu0 %v189
    %359 = vmatprep.subr.mxu0 %v192
    %360 = vmatpush1.msra.mxu0 %v191
    %361 = vmatprep.subr.mxu0 %v194
    %362 = vmatpush1.msra.mxu0 %v193
    %363 = vmatprep.subr.mxu0 %v196
    %364 = vmatpush1.msra.mxu0 %v195
    %365 = vmatprep.subr.mxu0 %v198
    %366 = vmatpush1.msra.mxu0 %v197
    %367 = vmatprep.subr.mxu0 %v200
    %368 = vmatpush1.msra.mxu0 %v199
    %369 = vmatprep.subr.mxu0 %v202
    %370 = vmatpush1.msra.mxu0 %v201
    %371 = vmatprep.subr.mxu0 %v204
    %372 = vmatpush1.msra.mxu0 %v203
    %373 = vmatprep.subr.mxu0 %v206
    %374 = vmatpush1.msra.mxu0 %v205
    %375 = vmatprep.subr.mxu0 %v208
    %376 = vmatpush1.msra.mxu0 %v207
    %377 = vmatprep.subr.mxu0 %v210
    %378 = vmatpush1.msra.mxu0 %v209
    %379 = vmatprep.subr.mxu0 %v212
    %380 = vmatpush1.msra.mxu0 %v211
    %381 = vmatprep.subr.mxu0 0.0
    %382 = vmatpush1.msra.mxu0 0.0
    %383 = vmatprep.subr.mxu0 0.0
    %384 = vmatpush1.msra.mxu0 0.0
    %385 = vmatprep.subr.mxu0 0.0
    %386 = vmatpush1.msra.mxu0 0.0
    %387 = vmatprep.subr.mxu0 0.0
    %388 = vmatpush1.msra.mxu0 0.0
    %389 = vmatprep.subr.mxu0 0.0
    %390 = vmatpush1.msra.mxu0 0.0
    %391 = vmatprep.subr.mxu0 0.0
    %392 = vmatpush1.msra.mxu0 0.0
    %393 = vmatprep.subr.mxu0 0.0
    %394 = vmatpush1.msra.mxu0 0.0
    %395 = vmatprep.subr.mxu0 0.0
    %396 = vmatpush1.msra.mxu0 0.0
    %397 = vmatprep.subr.mxu0 0.0
    %398 = vmatpush1.msra.mxu0 0.0
    %399 = vmatprep.subr.mxu0 0.0
    %400 = vmatpush1.msra.mxu0 0.0
    %401 = vmatprep.subr.mxu0 0.0
    %402 = vmatpush1.msra.mxu0 0.0
    %403 = vmatprep.subr.mxu0 0.0
    %404 = vmatpush1.msra.mxu0 0.0
    %405 = vmatprep.subr.mxu0 0.0
    %406 = vmatpush1.msra.mxu0 0.0
    %407 = vmatprep.subr.mxu0 0.0
    %408 = vmatpush1.msra.mxu0 0.0
    %409 = vmatprep.subr.mxu0 0.0
    %410 = vmatpush1.msra.mxu0 0.0
    %411 = vmatprep.subr.mxu0 0.0
    %412 = vmatpush1.msra.mxu0 0.0
    %413 = vmatprep.mubr.f32.mxu0 0.0
    %414 = vmatmul.mubr.f32.gmra.mrb[0].mxu0 %v337
    %v415 = vpop.f32.mrb[0].mxu0
    %v416 = vadd.f32 %v342, %v415
    %v417 = vpop.f32.mrb[0].mxu0
    %v418 = vadd.f32 %v346, %v417
    %419 = vdwg.mxu0
    %v420 = vxor.u32 %v416, 2147483648
    %v421 = vxor.u32 %v418, 2147483648
    %v422 = vmul.f32 %v420, 1.442695
    %v423 = vpow.pop %v422
    %v424 = vmul.f32 %v421, 1.442695
    %v425 = vpow.pop %v424
    %v426 = vadd.f32 %v423, 1.0
    %v427 = vadd.f32 %v425, 1.0
    %v428 = vrcp.pop %v426
    %v429 = vmul.f32 1.0, %v428
    %v430 = vrcp.pop %v427
    %v431 = vmul.f32 1.0, %v430
    %v432 = vtanh.pop %v418
    %v433 = vmul.f32 %v429, 0.0
    %v434 = vmul.f32 %v429, %v432
    %436 = vrot.lane.b32.xlu0 %v434, 64
    %v437 = vpop.permute.xlu0 %436
    %v439 = vadd.f32 %v433, %v437
    %v440 = vtanh.pop %v439
    %v441 = vmul.f32 %v431, %v440
    %s442 = scalar_lea.vmem [#allocation2], 1
    %v443 = vld [vmem:[%s442] ss:$8 sm:$0x3]
    %v445 = vsel %vm215, %v336, 0
    %447 = vmatprep.subr.mxu0 %v166
    %448 = vmatpush1.msra.mxu0 %v165
    %449 = vmatprep.subr.mxu0 %v168
    %450 = vmatpush1.msra.mxu0 %v167
    %451 = vmatprep.subr.mxu0 %v170
    %452 = vmatpush1.msra.mxu0 %v169
    %453 = vmatprep.subr.mxu0 %v172
    %454 = vmatpush1.msra.mxu0 %v171
    %455 = vmatprep.subr.mxu0 %v174
    %456 = vmatpush1.msra.mxu0 %v173
    %457 = vmatprep.subr.mxu0 %v176
    %458 = vmatpush1.msra.mxu0 %v175
    %459 = vmatprep.subr.mxu0 %v178
    %460 = vmatpush1.msra.mxu0 %v177
    %461 = vmatprep.subr.mxu0 %v180
    %462 = vmatpush1.msra.mxu0 %v179
    %463 = vmatprep.subr.mxu0 0.0
    %464 = vmatpush1.msra.mxu0 0.0
    %465 = vmatprep.subr.mxu0 0.0
    %466 = vmatpush1.msra.mxu0 0.0
    %467 = vmatprep.subr.mxu0 0.0
    %468 = vmatpush1.msra.mxu0 0.0
    %469 = vmatprep.subr.mxu0 0.0
    %470 = vmatpush1.msra.mxu0 0.0
    %471 = vmatprep.subr.mxu0 0.0
    %472 = vmatpush1.msra.mxu0 0.0
    %473 = vmatprep.subr.mxu0 0.0
    %474 = vmatpush1.msra.mxu0 0.0
    %475 = vmatprep.subr.mxu0 0.0
    %476 = vmatpush1.msra.mxu0 0.0
    %477 = vmatprep.subr.mxu0 0.0
    %478 = vmatpush1.msra.mxu0 0.0
    %479 = vmatprep.subr.mxu0 0.0
    %480 = vmatpush1.msra.mxu0 0.0
    %481 = vmatprep.subr.mxu0 0.0
    %482 = vmatpush1.msra.mxu0 0.0
    %483 = vmatprep.subr.mxu0 0.0
    %484 = vmatpush1.msra.mxu0 0.0
    %485 = vmatprep.subr.mxu0 0.0
    %486 = vmatpush1.msra.mxu0 0.0
    %487 = vmatprep.subr.mxu0 0.0
    %488 = vmatpush1.msra.mxu0 0.0
    %489 = vmatprep.subr.mxu0 0.0
    %490 = vmatpush1.msra.mxu0 0.0
    %491 = vmatprep.subr.mxu0 0.0
    %492 = vmatpush1.msra.mxu0 0.0
    %493 = vmatprep.subr.mxu0 0.0
    %494 = vmatpush1.msra.mxu0 0.0
    %495 = vmatprep.subr.mxu0 0.0
    %496 = vmatpush1.msra.mxu0 0.0
    %497 = vmatprep.subr.mxu0 0.0
    %498 = vmatpush1.msra.mxu0 0.0
    %499 = vmatprep.subr.mxu0 0.0
    %500 = vmatpush1.msra.mxu0 0.0
    %501 = vmatprep.subr.mxu0 0.0
    %502 = vmatpush1.msra.mxu0 0.0
    %503 = vmatprep.subr.mxu0 0.0
    %504 = vmatpush1.msra.mxu0 0.0
    %505 = vmatprep.subr.mxu0 0.0
    %506 = vmatpush1.msra.mxu0 0.0
    %507 = vmatprep.subr.mxu0 0.0
    %508 = vmatpush1.msra.mxu0 0.0
    %509 = vmatprep.subr.mxu0 0.0
    %510 = vmatpush1.msra.mxu0 0.0
    %511 = vmatprep.mubr.f32.mxu0 0.0
    %512 = vmatmul.mubr.f32.gmra.mrb[0].mxu0 %v445
    %v513 = vpop.f32.mrb[0].mxu0
    %v514 = vadd.f32 0.0, %v513
    %v515 = vpop.f32.mrb[0].mxu0
    %v516 = vadd.f32 0.0, %v515
    %517 = vdwg.mxu0
    %v520 = vcombine.low %v514, %v516
    %v522 = vunpack.c.l.s4 1966171168
    %v523 = vunpack.c.0.s8 %v522
    %v524 = vlaneseq
    %v525 = vshrl.u32 %v524, 7
    %v526 = vsub.s32 %v523, %v525
    %v527 = vrot.slane %v520, %v526
    %v529 = vunpack.c.l.s4 1966171168
    %v530 = vunpack.c.0.s8 %v529
    %v531 = vlaneseq
    %v532 = vshrl.u32 %v531, 7
    %v533 = vsub.s32 %v530, %v532
    %v534 = vrot.slane %v527, %v533
    %v536 = vadd.f32 %v443, %v534
    %v537 = vxor.u32 %v536, 2147483648
    %v538 = vmul.f32 %v537, 1.442695
    %v539 = vpow.pop %v538
    %v540 = vadd.f32 %v539, 1.0
    %v541 = vrcp.pop %v540
    %v542 = vmul.f32 1.0, %v541
    %v543 = vtanh.pop %v536
    %v544 = vmul.f32 %v542, %v325
    %v546 = vrot.slane %v543, 1
    %v548 = vmul.f32 %v542, %v546
    %550 = vrot.lane.b32.xlu0 %v548, 64
    %v551 = vpop.permute.xlu0 %550
    %v553 = vadd.f32 %v544, %v551
    %v554 = vtanh.pop %v553
    %556 = vrot.lane.b32.xlu0 %v542, 64
    %v557 = vpop.permute.xlu0 %556
    %v558 = vrot.slane %v557, 1
    %561 = vrot.lane.b32.xlu0 %v554, 64
    %v562 = vpop.permute.xlu0 %561
    %v564 = vmul.f32 %v558, %v562
    %v565 = vsel %vm215, %v564, %v441
    %566 = vmatprep.subr.mxu0 %v182
    %567 = vmatpush1.msra.mxu0 %v181
    %568 = vmatprep.subr.mxu0 %v184
    %569 = vmatpush1.msra.mxu0 %v183
    %570 = vmatprep.subr.mxu0 %v186
    %571 = vmatpush1.msra.mxu0 %v185
    %572 = vmatprep.subr.mxu0 %v188
    %573 = vmatpush1.msra.mxu0 %v187
    %574 = vmatprep.subr.mxu0 %v190
    %575 = vmatpush1.msra.mxu0 %v189
    %576 = vmatprep.subr.mxu0 %v192
    %577 = vmatpush1.msra.mxu0 %v191
    %578 = vmatprep.subr.mxu0 %v194
    %579 = vmatpush1.msra.mxu0 %v193
    %580 = vmatprep.subr.mxu0 %v196
    %581 = vmatpush1.msra.mxu0 %v195
    %582 = vmatprep.subr.mxu0 %v198
    %583 = vmatpush1.msra.mxu0 %v197
    %584 = vmatprep.subr.mxu0 %v200
    %585 = vmatpush1.msra.mxu0 %v199
    %586 = vmatprep.subr.mxu0 %v202
    %587 = vmatpush1.msra.mxu0 %v201
    %588 = vmatprep.subr.mxu0 %v204
    %589 = vmatpush1.msra.mxu0 %v203
    %590 = vmatprep.subr.mxu0 %v206
    %591 = vmatpush1.msra.mxu0 %v205
    %592 = vmatprep.subr.mxu0 %v208
    %593 = vmatpush1.msra.mxu0 %v207
    %594 = vmatprep.subr.mxu0 %v210
    %595 = vmatpush1.msra.mxu0 %v209
    %596 = vmatprep.subr.mxu0 %v212
    %597 = vmatpush1.msra.mxu0 %v211
    %598 = vmatprep.subr.mxu0 0.0
    %599 = vmatpush1.msra.mxu0 0.0
    %600 = vmatprep.subr.mxu0 0.0
    %601 = vmatpush1.msra.mxu0 0.0
    %602 = vmatprep.subr.mxu0 0.0
    %603 = vmatpush1.msra.mxu0 0.0
    %604 = vmatprep.subr.mxu0 0.0
    %605 = vmatpush1.msra.mxu0 0.0
    %606 = vmatprep.subr.mxu0 0.0
    %607 = vmatpush1.msra.mxu0 0.0
    %608 = vmatprep.subr.mxu0 0.0
    %609 = vmatpush1.msra.mxu0 0.0
    %610 = vmatprep.subr.mxu0 0.0
    %611 = vmatpush1.msra.mxu0 0.0
    %612 = vmatprep.subr.mxu0 0.0
    %613 = vmatpush1.msra.mxu0 0.0
    %614 = vmatprep.subr.mxu0 0.0
    %615 = vmatpush1.msra.mxu0 0.0
    %616 = vmatprep.subr.mxu0 0.0
    %617 = vmatpush1.msra.mxu0 0.0
    %618 = vmatprep.subr.mxu0 0.0
    %619 = vmatpush1.msra.mxu0 0.0
    %620 = vmatprep.subr.mxu0 0.0
    %621 = vmatpush1.msra.mxu0 0.0
    %622 = vmatprep.subr.mxu0 0.0
    %623 = vmatpush1.msra.mxu0 0.0
    %624 = vmatprep.subr.mxu0 0.0
    %625 = vmatpush1.msra.mxu0 0.0
    %626 = vmatprep.subr.mxu0 0.0
    %627 = vmatpush1.msra.mxu0 0.0
    %628 = vmatprep.subr.mxu0 0.0
    %629 = vmatpush1.msra.mxu0 0.0
    %630 = vmatprep.mubr.f32.mxu0 0.0
    %631 = vmatmul.mubr.f32.gmra.mrb[0].mxu0 %v565
    %v632 = vpop.f32.mrb[0].mxu0
    %v633 = vadd.f32 %v342, %v632
    %v634 = vpop.f32.mrb[0].mxu0
    %v635 = vadd.f32 %v346, %v634
    %636 = vdwg.mxu0
    %v637 = vxor.u32 %v633, 2147483648
    %v638 = vxor.u32 %v635, 2147483648
    %v639 = vmul.f32 %v637, 1.442695
    %v640 = vpow.pop %v639
    %v641 = vmul.f32 %v638, 1.442695
    %v642 = vpow.pop %v641
    %v643 = vadd.f32 %v640, 1.0
    %v644 = vadd.f32 %v642, 1.0
    %v645 = vrcp.pop %v643
    %v646 = vmul.f32 1.0, %v645
    %v647 = vrcp.pop %v644
    %v648 = vmul.f32 1.0, %v647
    %v649 = vtanh.pop %v635
    %v650 = vmul.f32 %v646, %v439
    %v651 = vmul.f32 %v646, %v649
    %653 = vrot.lane.b32.xlu0 %v651, 64
    %v654 = vpop.permute.xlu0 %653
    %v656 = vadd.f32 %v650, %v654
    %v657 = vtanh.pop %v656
    %v658 = vmul.f32 %v648, %v657
    %s659 = scalar_lea.vmem [#allocation2], 2
    %v660 = vld [vmem:[%s659] ss:$8 sm:$0x3]
    %v662 = vsel %vm215, %v564, 0
    %664 = vmatprep.subr.mxu0 %v166
    %665 = vmatpush1.msra.mxu0 %v165
    %666 = vmatprep.subr.mxu0 %v168
    %667 = vmatpush1.msra.mxu0 %v167
    %668 = vmatprep.subr.mxu0 %v170
    %669 = vmatpush1.msra.mxu0 %v169
    %670 = vmatprep.subr.mxu0 %v172
    %671 = vmatpush1.msra.mxu0 %v171
    %672 = vmatprep.subr.mxu0 %v174
    %673 = vmatpush1.msra.mxu0 %v173
    %674 = vmatprep.subr.mxu0 %v176
    %675 = vmatpush1.msra.mxu0 %v175
    %676 = vmatprep.subr.mxu0 %v178
    %677 = vmatpush1.msra.mxu0 %v177
    %678 = vmatprep.subr.mxu0 %v180
    %679 = vmatpush1.msra.mxu0 %v179
    %680 = vmatprep.subr.mxu0 0.0
    %681 = vmatpush1.msra.mxu0 0.0
    %682 = vmatprep.subr.mxu0 0.0
    %683 = vmatpush1.msra.mxu0 0.0
    %684 = vmatprep.subr.mxu0 0.0
    %685 = vmatpush1.msra.mxu0 0.0
    %686 = vmatprep.subr.mxu0 0.0
    %687 = vmatpush1.msra.mxu0 0.0
    %688 = vmatprep.subr.mxu0 0.0
    %689 = vmatpush1.msra.mxu0 0.0
    %690 = vmatprep.subr.mxu0 0.0
    %691 = vmatpush1.msra.mxu0 0.0
    %692 = vmatprep.subr.mxu0 0.0
    %693 = vmatpush1.msra.mxu0 0.0
    %694 = vmatprep.subr.mxu0 0.0
    %695 = vmatpush1.msra.mxu0 0.0
    %696 = vmatprep.subr.mxu0 0.0
    %697 = vmatpush1.msra.mxu0 0.0
    %698 = vmatprep.subr.mxu0 0.0
    %699 = vmatpush1.msra.mxu0 0.0
    %700 = vmatprep.subr.mxu0 0.0
    %701 = vmatpush1.msra.mxu0 0.0
    %702 = vmatprep.subr.mxu0 0.0
    %703 = vmatpush1.msra.mxu0 0.0
    %704 = vmatprep.subr.mxu0 0.0
    %705 = vmatpush1.msra.mxu0 0.0
    %706 = vmatprep.subr.mxu0 0.0
    %707 = vmatpush1.msra.mxu0 0.0
    %708 = vmatprep.subr.mxu0 0.0
    %709 = vmatpush1.msra.mxu0 0.0
    %710 = vmatprep.subr.mxu0 0.0
    %711 = vmatpush1.msra.mxu0 0.0
    %712 = vmatprep.subr.mxu0 0.0
    %713 = vmatpush1.msra.mxu0 0.0
    %714 = vmatprep.subr.mxu0 0.0
    %715 = vmatpush1.msra.mxu0 0.0
    %716 = vmatprep.subr.mxu0 0.0
    %717 = vmatpush1.msra.mxu0 0.0
    %718 = vmatprep.subr.mxu0 0.0
    %719 = vmatpush1.msra.mxu0 0.0
    %720 = vmatprep.subr.mxu0 0.0
    %721 = vmatpush1.msra.mxu0 0.0
    %722 = vmatprep.subr.mxu0 0.0
    %723 = vmatpush1.msra.mxu0 0.0
    %724 = vmatprep.subr.mxu0 0.0
    %725 = vmatpush1.msra.mxu0 0.0
    %726 = vmatprep.subr.mxu0 0.0
    %727 = vmatpush1.msra.mxu0 0.0
    %728 = vmatprep.mubr.f32.mxu0 0.0
    %729 = vmatmul.mubr.f32.gmra.mrb[0].mxu0 %v662
    %v730 = vpop.f32.mrb[0].mxu0
    %v731 = vadd.f32 0.0, %v730
    %v732 = vpop.f32.mrb[0].mxu0
    %v733 = vadd.f32 0.0, %v732
    %734 = vdwg.mxu0
    %v737 = vcombine.low %v731, %v733
    %v739 = vunpack.c.l.s4 1966171168
    %v740 = vunpack.c.0.s8 %v739
    %v741 = vlaneseq
    %v742 = vshrl.u32 %v741, 7
    %v743 = vsub.s32 %v740, %v742
    %v744 = vrot.slane %v737, %v743
    %v746 = vunpack.c.l.s4 1966171168
    %v747 = vunpack.c.0.s8 %v746
    %v748 = vlaneseq
    %v749 = vshrl.u32 %v748, 7
    %v750 = vsub.s32 %v747, %v749
    %v751 = vrot.slane %v744, %v750
    %v753 = vadd.f32 %v660, %v751
    %v754 = vxor.u32 %v753, 2147483648
    %v755 = vmul.f32 %v754, 1.442695
    %v756 = vpow.pop %v755
    %v757 = vadd.f32 %v756, 1.0
    %v758 = vrcp.pop %v757
    %v759 = vmul.f32 1.0, %v758
    %v760 = vtanh.pop %v753
    %v761 = vmul.f32 %v759, %v553
    %v763 = vrot.slane %v760, 1
    %v765 = vmul.f32 %v759, %v763
    %767 = vrot.lane.b32.xlu0 %v765, 64
    %v768 = vpop.permute.xlu0 %767
    %v770 = vadd.f32 %v761, %v768
    %v771 = vtanh.pop %v770
    %773 = vrot.lane.b32.xlu0 %v759, 64
    %v774 = vpop.permute.xlu0 %773
    %v775 = vrot.slane %v774, 1
    %778 = vrot.lane.b32.xlu0 %v771, 64
    %v779 = vpop.permute.xlu0 %778
    %v781 = vmul.f32 %v775, %v779
    %v782 = vsel %vm215, %v781, %v658
    %783 = vmatprep.subr.mxu0 %v182
    %784 = vmatpush1.msra.mxu0 %v181
    %785 = vmatprep.subr.mxu0 %v184
    %786 = vmatpush1.msra.mxu0 %v183
    %787 = vmatprep.subr.mxu0 %v186
    %788 = vmatpush1.msra.mxu0 %v185
    %789 = vmatprep.subr.mxu0 %v188
    %790 = vmatpush1.msra.mxu0 %v187
    %791 = vmatprep.subr.mxu0 %v190
    %792 = vmatpush1.msra.mxu0 %v189
    %793 = vmatprep.subr.mxu0 %v192
    %794 = vmatpush1.msra.mxu0 %v191
    %795 = vmatprep.subr.mxu0 %v194
    %796 = vmatpush1.msra.mxu0 %v193
    %797 = vmatprep.subr.mxu0 %v196
    %798 = vmatpush1.msra.mxu0 %v195
    %799 = vmatprep.subr.mxu0 %v198
    %800 = vmatpush1.msra.mxu0 %v197
    %801 = vmatprep.subr.mxu0 %v200
    %802 = vmatpush1.msra.mxu0 %v199
    %803 = vmatprep.subr.mxu0 %v202
    %804 = vmatpush1.msra.mxu0 %v201
    %805 = vmatprep.subr.mxu0 %v204
    %806 = vmatpush1.msra.mxu0 %v203
    %807 = vmatprep.subr.mxu0 %v206
    %808 = vmatpush1.msra.mxu0 %v205
    %809 = vmatprep.subr.mxu0 %v208
    %810 = vmatpush1.msra.mxu0 %v207
    %811 = vmatprep.subr.mxu0 %v210
    %812 = vmatpush1.msra.mxu0 %v209
    %813 = vmatprep.subr.mxu0 %v212
    %814 = vmatpush1.msra.mxu0 %v211
    %815 = vmatprep.subr.mxu0 0.0
    %816 = vmatpush1.msra.mxu0 0.0
    %817 = vmatprep.subr.mxu0 0.0
    %818 = vmatpush1.msra.mxu0 0.0
    %819 = vmatprep.subr.mxu0 0.0
    %820 = vmatpush1.msra.mxu0 0.0
    %821 = vmatprep.subr.mxu0 0.0
    %822 = vmatpush1.msra.mxu0 0.0
    %823 = vmatprep.subr.mxu0 0.0
    %824 = vmatpush1.msra.mxu0 0.0
    %825 = vmatprep.subr.mxu0 0.0
    %826 = vmatpush1.msra.mxu0 0.0
    %827 = vmatprep.subr.mxu0 0.0
    %828 = vmatpush1.msra.mxu0 0.0
    %829 = vmatprep.subr.mxu0 0.0
    %830 = vmatpush1.msra.mxu0 0.0
    %831 = vmatprep.subr.mxu0 0.0
    %832 = vmatpush1.msra.mxu0 0.0
    %833 = vmatprep.subr.mxu0 0.0
    %834 = vmatpush1.msra.mxu0 0.0
    %835 = vmatprep.subr.mxu0 0.0
    %836 = vmatpush1.msra.mxu0 0.0
    %837 = vmatprep.subr.mxu0 0.0
    %838 = vmatpush1.msra.mxu0 0.0
    %839 = vmatprep.subr.mxu0 0.0
    %840 = vmatpush1.msra.mxu0 0.0
    %841 = vmatprep.subr.mxu0 0.0
    %842 = vmatpush1.msra.mxu0 0.0
    %843 = vmatprep.subr.mxu0 0.0
    %844 = vmatpush1.msra.mxu0 0.0
    %845 = vmatprep.subr.mxu0 0.0
    %846 = vmatpush1.msra.mxu0 0.0
    %847 = vmatprep.mubr.f32.mxu0 0.0
    %848 = vmatmul.mubr.f32.gmra.mrb[0].mxu0 %v782
    %v849 = vpop.f32.mrb[0].mxu0
    %v850 = vadd.f32 %v342, %v849
    %v851 = vpop.f32.mrb[0].mxu0
    %v852 = vadd.f32 %v346, %v851
    %853 = vdwg.mxu0
    %v854 = vxor.u32 %v850, 2147483648
    %v855 = vxor.u32 %v852, 2147483648
    %v856 = vmul.f32 %v854, 1.442695
    %v857 = vpow.pop %v856
    %v858 = vmul.f32 %v855, 1.442695
    %v859 = vpow.pop %v858
    %v860 = vadd.f32 %v857, 1.0
    %v861 = vadd.f32 %v859, 1.0
    %v862 = vrcp.pop %v860
    %v863 = vmul.f32 1.0, %v862
    %v864 = vrcp.pop %v861
    %v865 = vmul.f32 1.0, %v864
    %v866 = vtanh.pop %v852
    %v867 = vmul.f32 %v863, %v656
    %v868 = vmul.f32 %v863, %v866
    %870 = vrot.lane.b32.xlu0 %v868, 64
    %v871 = vpop.permute.xlu0 %870
    %v873 = vadd.f32 %v867, %v871
    %v874 = vtanh.pop %v873
    %v875 = vmul.f32 %v865, %v874
    %s876 = scalar_lea.vmem [#allocation2], 3
    %v877 = vld [vmem:[%s876] ss:$8 sm:$0x3]
    %v879 = vsel %vm215, %v781, 0
    %881 = vmatprep.subr.mxu0 %v166
    %882 = vmatpush1.msra.mxu0 %v165
    %883 = vmatprep.subr.mxu0 %v168
    %884 = vmatpush1.msra.mxu0 %v167
    %885 = vmatprep.subr.mxu0 %v170
    %886 = vmatpush1.msra.mxu0 %v169
    %887 = vmatprep.subr.mxu0 %v172
    %888 = vmatpush1.msra.mxu0 %v171
    %889 = vmatprep.subr.mxu0 %v174
    %890 = vmatpush1.msra.mxu0 %v173
    %891 = vmatprep.subr.mxu0 %v176
    %892 = vmatpush1.msra.mxu0 %v175
    %893 = vmatprep.subr.mxu0 %v178
    %894 = vmatpush1.msra.mxu0 %v177
    %895 = vmatprep.subr.mxu0 %v180
    %896 = vmatpush1.msra.mxu0 %v179
    %897 = vmatprep.subr.mxu0 0.0
    %898 = vmatpush1.msra.mxu0 0.0
    %899 = vmatprep.subr.mxu0 0.0
    %900 = vmatpush1.msra.mxu0 0.0
    %901 = vmatprep.subr.mxu0 0.0
    %902 = vmatpush1.msra.mxu0 0.0
    %903 = vmatprep.subr.mxu0 0.0
    %904 = vmatpush1.msra.mxu0 0.0
    %905 = vmatprep.subr.mxu0 0.0
    %906 = vmatpush1.msra.mxu0 0.0
    %907 = vmatprep.subr.mxu0 0.0
    %908 = vmatpush1.msra.mxu0 0.0
    %909 = vmatprep.subr.mxu0 0.0
    %910 = vmatpush1.msra.mxu0 0.0
    %911 = vmatprep.subr.mxu0 0.0
    %912 = vmatpush1.msra.mxu0 0.0
    %913 = vmatprep.subr.mxu0 0.0
    %914 = vmatpush1.msra.mxu0 0.0
    %915 = vmatprep.subr.mxu0 0.0
    %916 = vmatpush1.msra.mxu0 0.0
    %917 = vmatprep.subr.mxu0 0.0
    %918 = vmatpush1.msra.mxu0 0.0
    %919 = vmatprep.subr.mxu0 0.0
    %920 = vmatpush1.msra.mxu0 0.0
    %921 = vmatprep.subr.mxu0 0.0
    %922 = vmatpush1.msra.mxu0 0.0
    %923 = vmatprep.subr.mxu0 0.0
    %924 = vmatpush1.msra.mxu0 0.0
    %925 = vmatprep.subr.mxu0 0.0
    %926 = vmatpush1.msra.mxu0 0.0
    %927 = vmatprep.subr.mxu0 0.0
    %928 = vmatpush1.msra.mxu0 0.0
    %929 = vmatprep.subr.mxu0 0.0
    %930 = vmatpush1.msra.mxu0 0.0
    %931 = vmatprep.subr.mxu0 0.0
    %932 = vmatpush1.msra.mxu0 0.0
    %933 = vmatprep.subr.mxu0 0.0
    %934 = vmatpush1.msra.mxu0 0.0
    %935 = vmatprep.subr.mxu0 0.0
    %936 = vmatpush1.msra.mxu0 0.0
    %937 = vmatprep.subr.mxu0 0.0
    %938 = vmatpush1.msra.mxu0 0.0
    %939 = vmatprep.subr.mxu0 0.0
    %940 = vmatpush1.msra.mxu0 0.0
    %941 = vmatprep.subr.mxu0 0.0
    %942 = vmatpush1.msra.mxu0 0.0
    %943 = vmatprep.subr.mxu0 0.0
    %944 = vmatpush1.msra.mxu0 0.0
    %945 = vmatprep.mubr.f32.mxu0 0.0
    %946 = vmatmul.mubr.f32.gmra.mrb[0].mxu0 %v879
    %v947 = vpop.f32.mrb[0].mxu0
    %v948 = vadd.f32 0.0, %v947
    %v949 = vpop.f32.mrb[0].mxu0
    %v950 = vadd.f32 0.0, %v949
    %951 = vdwg.mxu0
    %v954 = vcombine.low %v948, %v950
    %v956 = vunpack.c.l.s4 1966171168
    %v957 = vunpack.c.0.s8 %v956
    %v958 = vlaneseq
    %v959 = vshrl.u32 %v958, 7
    %v960 = vsub.s32 %v957, %v959
    %v961 = vrot.slane %v954, %v960
    %v963 = vunpack.c.l.s4 1966171168
    %v964 = vunpack.c.0.s8 %v963
    %v965 = vlaneseq
    %v966 = vshrl.u32 %v965, 7
    %v967 = vsub.s32 %v964, %v966
    %v968 = vrot.slane %v961, %v967
    %v970 = vadd.f32 %v877, %v968
    %v971 = vxor.u32 %v970, 2147483648
    %v972 = vmul.f32 %v971, 1.442695
    %v973 = vpow.pop %v972
    %v974 = vadd.f32 %v973, 1.0
    %v975 = vrcp.pop %v974
    %v976 = vmul.f32 1.0, %v975
    %v977 = vtanh.pop %v970
    %v978 = vmul.f32 %v976, %v770
    %v980 = vrot.slane %v977, 1
    %v982 = vmul.f32 %v976, %v980
    %984 = vrot.lane.b32.xlu0 %v982, 64
    %v985 = vpop.permute.xlu0 %984
    %v987 = vadd.f32 %v978, %v985
    %v988 = vtanh.pop %v987
    %990 = vrot.lane.b32.xlu0 %v976, 64
    %v991 = vpop.permute.xlu0 %990
    %v992 = vrot.slane %v991, 1
    %995 = vrot.lane.b32.xlu0 %v988, 64
    %v996 = vpop.permute.xlu0 %995
    %v998 = vmul.f32 %v992, %v996
    %v999 = vsel %vm215, %v998, %v875
    %1000 = vmatprep.subr.mxu0 %v182
    %1001 = vmatpush1.msra.mxu0 %v181
    %1002 = vmatprep.subr.mxu0 %v184
    %1003 = vmatpush1.msra.mxu0 %v183
    %1004 = vmatprep.subr.mxu0 %v186
    %1005 = vmatpush1.msra.mxu0 %v185
    %1006 = vmatprep.subr.mxu0 %v188
    %1007 = vmatpush1.msra.mxu0 %v187
    %1008 = vmatprep.subr.mxu0 %v190
    %1009 = vmatpush1.msra.mxu0 %v189
    %1010 = vmatprep.subr.mxu0 %v192
    %1011 = vmatpush1.msra.mxu0 %v191
    %1012 = vmatprep.subr.mxu0 %v194
    %1013 = vmatpush1.msra.mxu0 %v193
    %1014 = vmatprep.subr.mxu0 %v196
    %1015 = vmatpush1.msra.mxu0 %v195
    %1016 = vmatprep.subr.mxu0 %v198
    %1017 = vmatpush1.msra.mxu0 %v197
    %1018 = vmatprep.subr.mxu0 %v200
    %1019 = vmatpush1.msra.mxu0 %v199
    %1020 = vmatprep.subr.mxu0 %v202
    %1021 = vmatpush1.msra.mxu0 %v201
    %1022 = vmatprep.subr.mxu0 %v204
    %1023 = vmatpush1.msra.mxu0 %v203
    %1024 = vmatprep.subr.mxu0 %v206
    %1025 = vmatpush1.msra.mxu0 %v205
    %1026 = vmatprep.subr.mxu0 %v208
    %1027 = vmatpush1.msra.mxu0 %v207
    %1028 = vmatprep.subr.mxu0 %v210
    %1029 = vmatpush1.msra.mxu0 %v209
    %1030 = vmatprep.subr.mxu0 %v212
    %1031 = vmatpush1.msra.mxu0 %v211
    %1032 = vmatprep.subr.mxu0 0.0
    %1033 = vmatpush1.msra.mxu0 0.0
    %1034 = vmatprep.subr.mxu0 0.0
    %1035 = vmatpush1.msra.mxu0 0.0
    %1036 = vmatprep.subr.mxu0 0.0
    %1037 = vmatpush1.msra.mxu0 0.0
    %1038 = vmatprep.subr.mxu0 0.0
    %1039 = vmatpush1.msra.mxu0 0.0
    %1040 = vmatprep.subr.mxu0 0.0
    %1041 = vmatpush1.msra.mxu0 0.0
    %1042 = vmatprep.subr.mxu0 0.0
    %1043 = vmatpush1.msra.mxu0 0.0
    %1044 = vmatprep.subr.mxu0 0.0
    %1045 = vmatpush1.msra.mxu0 0.0
    %1046 = vmatprep.subr.mxu0 0.0
    %1047 = vmatpush1.msra.mxu0 0.0
    %1048 = vmatprep.subr.mxu0 0.0
    %1049 = vmatpush1.msra.mxu0 0.0
    %1050 = vmatprep.subr.mxu0 0.0
    %1051 = vmatpush1.msra.mxu0 0.0
    %1052 = vmatprep.subr.mxu0 0.0
    %1053 = vmatpush1.msra.mxu0 0.0
    %1054 = vmatprep.subr.mxu0 0.0
    %1055 = vmatpush1.msra.mxu0 0.0
    %1056 = vmatprep.subr.mxu0 0.0
    %1057 = vmatpush1.msra.mxu0 0.0
    %1058 = vmatprep.subr.mxu0 0.0
    %1059 = vmatpush1.msra.mxu0 0.0
    %1060 = vmatprep.subr.mxu0 0.0
    %1061 = vmatpush1.msra.mxu0 0.0
    %1062 = vmatprep.subr.mxu0 0.0
    %1063 = vmatpush1.msra.mxu0 0.0
    %1064 = vmatprep.mubr.f32.mxu0 0.0
    %1065 = vmatmul.mubr.f32.gmra.mrb[0].mxu0 %v999
    %v1066 = vpop.f32.mrb[0].mxu0
    %v1067 = vadd.f32 %v342, %v1066
    %v1068 = vpop.f32.mrb[0].mxu0
    %v1069 = vadd.f32 %v346, %v1068
    %1070 = vdwg.mxu0
    %v1071 = vxor.u32 %v1067, 2147483648
    %v1072 = vxor.u32 %v1069, 2147483648
    %v1073 = vmul.f32 %v1071, 1.442695
    %v1074 = vpow.pop %v1073
    %v1075 = vmul.f32 %v1072, 1.442695
    %v1076 = vpow.pop %v1075
    %v1077 = vadd.f32 %v1074, 1.0
    %v1078 = vadd.f32 %v1076, 1.0
    %v1079 = vrcp.pop %v1077
    %v1080 = vmul.f32 1.0, %v1079
    %v1081 = vrcp.pop %v1078
    %v1082 = vmul.f32 1.0, %v1081
    %v1083 = vtanh.pop %v1069
    %v1084 = vmul.f32 %v1080, %v873
    %v1085 = vmul.f32 %v1080, %v1083
    %1087 = vrot.lane.b32.xlu0 %v1085, 64
    %v1088 = vpop.permute.xlu0 %1087
    %v1090 = vadd.f32 %v1084, %v1088
    %v1091 = vtanh.pop %v1090
    %v1092 = vmul.f32 %v1082, %v1091
    %s1093 = scalar_lea.vmem [#allocation2], 4
    %v1094 = vld [vmem:[%s1093] ss:$8 sm:$0x3]
    %v1096 = vsel %vm215, %v998, 0
    %1098 = vmatprep.subr.mxu0 %v166
    %1099 = vmatpush1.msra.mxu0 %v165
    %1100 = vmatprep.subr.mxu0 %v168
    %1101 = vmatpush1.msra.mxu0 %v167
    %1102 = vmatprep.subr.mxu0 %v170
    %1103 = vmatpush1.msra.mxu0 %v169
    %1104 = vmatprep.subr.mxu0 %v172
    %1105 = vmatpush1.msra.mxu0 %v171
    %1106 = vmatprep.subr.mxu0 %v174
    %1107 = vmatpush1.msra.mxu0 %v173
    %1108 = vmatprep.subr.mxu0 %v176
    %1109 = vmatpush1.msra.mxu0 %v175
    %1110 = vmatprep.subr.mxu0 %v178
    %1111 = vmatpush1.msra.mxu0 %v177
    %1112 = vmatprep.subr.mxu0 %v180
    %1113 = vmatpush1.msra.mxu0 %v179
    %1114 = vmatprep.subr.mxu0 0.0
    %1115 = vmatpush1.msra.mxu0 0.0
    %1116 = vmatprep.subr.mxu0 0.0
    %1117 = vmatpush1.msra.mxu0 0.0
    %1118 = vmatprep.subr.mxu0 0.0
    %1119 = vmatpush1.msra.mxu0 0.0
    %1120 = vmatprep.subr.mxu0 0.0
    %1121 = vmatpush1.msra.mxu0 0.0
    %1122 = vmatprep.subr.mxu0 0.0
    %1123 = vmatpush1.msra.mxu0 0.0
    %1124 = vmatprep.subr.mxu0 0.0
    %1125 = vmatpush1.msra.mxu0 0.0
    %1126 = vmatprep.subr.mxu0 0.0
    %1127 = vmatpush1.msra.mxu0 0.0
    %1128 = vmatprep.subr.mxu0 0.0
    %1129 = vmatpush1.msra.mxu0 0.0
    %1130 = vmatprep.subr.mxu0 0.0
    %1131 = vmatpush1.msra.mxu0 0.0
    %1132 = vmatprep.subr.mxu0 0.0
    %1133 = vmatpush1.msra.mxu0 0.0
    %1134 = vmatprep.subr.mxu0 0.0
    %1135 = vmatpush1.msra.mxu0 0.0
    %1136 = vmatprep.subr.mxu0 0.0
    %1137 = vmatpush1.msra.mxu0 0.0
    %1138 = vmatprep.subr.mxu0 0.0
    %1139 = vmatpush1.msra.mxu0 0.0
    %1140 = vmatprep.subr.mxu0 0.0
    %1141 = vmatpush1.msra.mxu0 0.0
    %1142 = vmatprep.subr.mxu0 0.0
    %1143 = vmatpush1.msra.mxu0 0.0
    %1144 = vmatprep.subr.mxu0 0.0
    %1145 = vmatpush1.msra.mxu0 0.0
    %1146 = vmatprep.subr.mxu0 0.0
    %1147 = vmatpush1.msra.mxu0 0.0
    %1148 = vmatprep.subr.mxu0 0.0
    %1149 = vmatpush1.msra.mxu0 0.0
    %1150 = vmatprep.subr.mxu0 0.0
    %1151 = vmatpush1.msra.mxu0 0.0
    %1152 = vmatprep.subr.mxu0 0.0
    %1153 = vmatpush1.msra.mxu0 0.0
    %1154 = vmatprep.subr.mxu0 0.0
    %1155 = vmatpush1.msra.mxu0 0.0
    %1156 = vmatprep.subr.mxu0 0.0
    %1157 = vmatpush1.msra.mxu0 0.0
    %1158 = vmatprep.subr.mxu0 0.0
    %1159 = vmatpush1.msra.mxu0 0.0
    %1160 = vmatprep.subr.mxu0 0.0
    %1161 = vmatpush1.msra.mxu0 0.0
    %1162 = vmatprep.mubr.f32.mxu0 0.0
    %1163 = vmatmul.mubr.f32.gmra.mrb[0].mxu0 %v1096
    %v1164 = vpop.f32.mrb[0].mxu0
    %v1165 = vadd.f32 0.0, %v1164
    %v1166 = vpop.f32.mrb[0].mxu0
    %v1167 = vadd.f32 0.0, %v1166
    %1168 = vdwg.mxu0
    %v1171 = vcombine.low %v1165, %v1167
    %v1173 = vunpack.c.l.s4 1966171168
    %v1174 = vunpack.c.0.s8 %v1173
    %v1175 = vlaneseq
    %v1176 = vshrl.u32 %v1175, 7
    %v1177 = vsub.s32 %v1174, %v1176
    %v1178 = vrot.slane %v1171, %v1177
    %v1180 = vunpack.c.l.s4 1966171168
    %v1181 = vunpack.c.0.s8 %v1180
    %v1182 = vlaneseq
    %v1183 = vshrl.u32 %v1182, 7
    %v1184 = vsub.s32 %v1181, %v1183
    %v1185 = vrot.slane %v1178, %v1184
    %v1187 = vadd.f32 %v1094, %v1185
    %v1188 = vxor.u32 %v1187, 2147483648
    %v1189 = vmul.f32 %v1188, 1.442695
    %v1190 = vpow.pop %v1189
    %v1191 = vadd.f32 %v1190, 1.0
    %v1192 = vrcp.pop %v1191
    %v1193 = vmul.f32 1.0, %v1192
    %v1194 = vtanh.pop %v1187
    %v1195 = vmul.f32 %v1193, %v987
    %v1197 = vrot.slane %v1194, 1
    %v1199 = vmul.f32 %v1193, %v1197
    %1201 = vrot.lane.b32.xlu0 %v1199, 64
    %v1202 = vpop.permute.xlu0 %1201
    %v1204 = vadd.f32 %v1195, %v1202
    %v1205 = vtanh.pop %v1204
    %1207 = vrot.lane.b32.xlu0 %v1193, 64
    %v1208 = vpop.permute.xlu0 %1207
    %v1209 = vrot.slane %v1208, 1
    %1212 = vrot.lane.b32.xlu0 %v1205, 64
    %v1213 = vpop.permute.xlu0 %1212
    %v1215 = vmul.f32 %v1209, %v1213
    %v1216 = vsel %vm215, %v1215, %v1092
    %1217 = vmatprep.subr.mxu0 %v182
    %1218 = vmatpush1.msra.mxu0 %v181
    %1219 = vmatprep.subr.mxu0 %v184
    %1220 = vmatpush1.msra.mxu0 %v183
    %1221 = vmatprep.subr.mxu0 %v186
    %1222 = vmatpush1.msra.mxu0 %v185
    %1223 = vmatprep.subr.mxu0 %v188
    %1224 = vmatpush1.msra.mxu0 %v187
    %1225 = vmatprep.subr.mxu0 %v190
    %1226 = vmatpush1.msra.mxu0 %v189
    %1227 = vmatprep.subr.mxu0 %v192
    %1228 = vmatpush1.msra.mxu0 %v191
    %1229 = vmatprep.subr.mxu0 %v194
    %1230 = vmatpush1.msra.mxu0 %v193
    %1231 = vmatprep.subr.mxu0 %v196
    %1232 = vmatpush1.msra.mxu0 %v195
    %1233 = vmatprep.subr.mxu0 %v198
    %1234 = vmatpush1.msra.mxu0 %v197
    %1235 = vmatprep.subr.mxu0 %v200
    %1236 = vmatpush1.msra.mxu0 %v199
    %1237 = vmatprep.subr.mxu0 %v202
    %1238 = vmatpush1.msra.mxu0 %v201
    %1239 = vmatprep.subr.mxu0 %v204
    %1240 = vmatpush1.msra.mxu0 %v203
    %1241 = vmatprep.subr.mxu0 %v206
    %1242 = vmatpush1.msra.mxu0 %v205
    %1243 = vmatprep.subr.mxu0 %v208
    %1244 = vmatpush1.msra.mxu0 %v207
    %1245 = vmatprep.subr.mxu0 %v210
    %1246 = vmatpush1.msra.mxu0 %v209
    %1247 = vmatprep.subr.mxu0 %v212
    %1248 = vmatpush1.msra.mxu0 %v211
    %1249 = vmatprep.subr.mxu0 0.0
    %1250 = vmatpush1.msra.mxu0 0.0
    %1251 = vmatprep.subr.mxu0 0.0
    %1252 = vmatpush1.msra.mxu0 0.0
    %1253 = vmatprep.subr.mxu0 0.0
    %1254 = vmatpush1.msra.mxu0 0.0
    %1255 = vmatprep.subr.mxu0 0.0
    %1256 = vmatpush1.msra.mxu0 0.0
    %1257 = vmatprep.subr.mxu0 0.0
    %1258 = vmatpush1.msra.mxu0 0.0
    %1259 = vmatprep.subr.mxu0 0.0
    %1260 = vmatpush1.msra.mxu0 0.0
    %1261 = vmatprep.subr.mxu0 0.0
    %1262 = vmatpush1.msra.mxu0 0.0
    %1263 = vmatprep.subr.mxu0 0.0
    %1264 = vmatpush1.msra.mxu0 0.0
    %1265 = vmatprep.subr.mxu0 0.0
    %1266 = vmatpush1.msra.mxu0 0.0
    %1267 = vmatprep.subr.mxu0 0.0
    %1268 = vmatpush1.msra.mxu0 0.0
    %1269 = vmatprep.subr.mxu0 0.0
    %1270 = vmatpush1.msra.mxu0 0.0
    %1271 = vmatprep.subr.mxu0 0.0
    %1272 = vmatpush1.msra.mxu0 0.0
    %1273 = vmatprep.subr.mxu0 0.0
    %1274 = vmatpush1.msra.mxu0 0.0
    %1275 = vmatprep.subr.mxu0 0.0
    %1276 = vmatpush1.msra.mxu0 0.0
    %1277 = vmatprep.subr.mxu0 0.0
    %1278 = vmatpush1.msra.mxu0 0.0
    %1279 = vmatprep.subr.mxu0 0.0
    %1280 = vmatpush1.msra.mxu0 0.0
    %1281 = vmatprep.mubr.f32.mxu0 0.0
    %1282 = vmatmul.mubr.f32.gmra.mrb[0].mxu0 %v1216
    %v1283 = vpop.f32.mrb[0].mxu0
    %v1284 = vadd.f32 %v342, %v1283
    %v1285 = vpop.f32.mrb[0].mxu0
    %v1286 = vadd.f32 %v346, %v1285
    %1287 = vdwg.mxu0
    %v1288 = vxor.u32 %v1284, 2147483648
    %v1289 = vxor.u32 %v1286, 2147483648
    %v1290 = vmul.f32 %v1288, 1.442695
    %v1291 = vpow.pop %v1290
    %v1292 = vmul.f32 %v1289, 1.442695
    %v1293 = vpow.pop %v1292
    %v1294 = vadd.f32 %v1291, 1.0
    %v1295 = vadd.f32 %v1293, 1.0
    %v1296 = vrcp.pop %v1294
    %v1297 = vmul.f32 1.0, %v1296
    %v1298 = vrcp.pop %v1295
    %v1299 = vmul.f32 1.0, %v1298
    %v1300 = vtanh.pop %v1286
    %v1301 = vmul.f32 %v1297, %v1090
    %v1302 = vmul.f32 %v1297, %v1300
    %1304 = vrot.lane.b32.xlu0 %v1302, 64
    %v1305 = vpop.permute.xlu0 %1304
    %v1307 = vadd.f32 %v1301, %v1305
    %v1308 = vtanh.pop %v1307
    %v1309 = vmul.f32 %v1299, %v1308
    %s1310 = scalar_lea.vmem [#allocation2], 5
    %v1311 = vld [vmem:[%s1310] ss:$8 sm:$0x3]
    %v1313 = vsel %vm215, %v1215, 0
    %1315 = vmatprep.subr.mxu0 %v166
    %1316 = vmatpush1.msra.mxu0 %v165
    %1317 = vmatprep.subr.mxu0 %v168
    %1318 = vmatpush1.msra.mxu0 %v167
    %1319 = vmatprep.subr.mxu0 %v170
    %1320 = vmatpush1.msra.mxu0 %v169
    %1321 = vmatprep.subr.mxu0 %v172
    %1322 = vmatpush1.msra.mxu0 %v171
    %1323 = vmatprep.subr.mxu0 %v174
    %1324 = vmatpush1.msra.mxu0 %v173
    %1325 = vmatprep.subr.mxu0 %v176
    %1326 = vmatpush1.msra.mxu0 %v175
    %1327 = vmatprep.subr.mxu0 %v178
    %1328 = vmatpush1.msra.mxu0 %v177
    %1329 = vmatprep.subr.mxu0 %v180
    %1330 = vmatpush1.msra.mxu0 %v179
    %1331 = vmatprep.subr.mxu0 0.0
    %1332 = vmatpush1.msra.mxu0 0.0
    %1333 = vmatprep.subr.mxu0 0.0
    %1334 = vmatpush1.msra.mxu0 0.0
    %1335 = vmatprep.subr.mxu0 0.0
    %1336 = vmatpush1.msra.mxu0 0.0
    %1337 = vmatprep.subr.mxu0 0.0
    %1338 = vmatpush1.msra.mxu0 0.0
    %1339 = vmatprep.subr.mxu0 0.0
    %1340 = vmatpush1.msra.mxu0 0.0
    %1341 = vmatprep.subr.mxu0 0.0
    %1342 = vmatpush1.msra.mxu0 0.0
    %1343 = vmatprep.subr.mxu0 0.0
    %1344 = vmatpush1.msra.mxu0 0.0
    %1345 = vmatprep.subr.mxu0 0.0
    %1346 = vmatpush1.msra.mxu0 0.0
    %1347 = vmatprep.subr.mxu0 0.0
    %1348 = vmatpush1.msra.mxu0 0.0
    %1349 = vmatprep.subr.mxu0 0.0
    %1350 = vmatpush1.msra.mxu0 0.0
    %1351 = vmatprep.subr.mxu0 0.0
    %1352 = vmatpush1.msra.mxu0 0.0
    %1353 = vmatprep.subr.mxu0 0.0
    %1354 = vmatpush1.msra.mxu0 0.0
    %1355 = vmatprep.subr.mxu0 0.0
    %1356 = vmatpush1.msra.mxu0 0.0
    %1357 = vmatprep.subr.mxu0 0.0
    %1358 = vmatpush1.msra.mxu0 0.0
    %1359 = vmatprep.subr.mxu0 0.0
    %1360 = vmatpush1.msra.mxu0 0.0
    %1361 = vmatprep.subr.mxu0 0.0
    %1362 = vmatpush1.msra.mxu0 0.0
    %1363 = vmatprep.subr.mxu0 0.0
    %1364 = vmatpush1.msra.mxu0 0.0
    %1365 = vmatprep.subr.mxu0 0.0
    %1366 = vmatpush1.msra.mxu0 0.0
    %1367 = vmatprep.subr.mxu0 0.0
    %1368 = vmatpush1.msra.mxu0 0.0
    %1369 = vmatprep.subr.mxu0 0.0
    %1370 = vmatpush1.msra.mxu0 0.0
    %1371 = vmatprep.subr.mxu0 0.0
    %1372 = vmatpush1.msra.mxu0 0.0
    %1373 = vmatprep.subr.mxu0 0.0
    %1374 = vmatpush1.msra.mxu0 0.0
    %1375 = vmatprep.subr.mxu0 0.0
    %1376 = vmatpush1.msra.mxu0 0.0
    %1377 = vmatprep.subr.mxu0 0.0
    %1378 = vmatpush1.msra.mxu0 0.0
    %1379 = vmatprep.mubr.f32.mxu0 0.0
    %1380 = vmatmul.mubr.f32.gmra.mrb[0].mxu0 %v1313
    %v1381 = vpop.f32.mrb[0].mxu0
    %v1382 = vadd.f32 0.0, %v1381
    %v1383 = vpop.f32.mrb[0].mxu0
    %v1384 = vadd.f32 0.0, %v1383
    %1385 = vdwg.mxu0
    %v1388 = vcombine.low %v1382, %v1384
    %v1390 = vunpack.c.l.s4 1966171168
    %v1391 = vunpack.c.0.s8 %v1390
    %v1392 = vlaneseq
    %v1393 = vshrl.u32 %v1392, 7
    %v1394 = vsub.s32 %v1391, %v1393
    %v1395 = vrot.slane %v1388, %v1394
    %v1397 = vunpack.c.l.s4 1966171168
    %v1398 = vunpack.c.0.s8 %v1397
    %v1399 = vlaneseq
    %v1400 = vshrl.u32 %v1399, 7
    %v1401 = vsub.s32 %v1398, %v1400
    %v1402 = vrot.slane %v1395, %v1401
    %v1404 = vadd.f32 %v1311, %v1402
    %v1405 = vxor.u32 %v1404, 2147483648
    %v1406 = vmul.f32 %v1405, 1.442695
    %v1407 = vpow.pop %v1406
    %v1408 = vadd.f32 %v1407, 1.0
    %v1409 = vrcp.pop %v1408
    %v1410 = vmul.f32 1.0, %v1409
    %v1411 = vtanh.pop %v1404
    %v1412 = vmul.f32 %v1410, %v1204
    %v1414 = vrot.slane %v1411, 1
    %v1416 = vmul.f32 %v1410, %v1414
    %1418 = vrot.lane.b32.xlu0 %v1416, 64
    %v1419 = vpop.permute.xlu0 %1418
    %v1421 = vadd.f32 %v1412, %v1419
    %v1422 = vtanh.pop %v1421
    %1424 = vrot.lane.b32.xlu0 %v1410, 64
    %v1425 = vpop.permute.xlu0 %1424
    %v1426 = vrot.slane %v1425, 1
    %1429 = vrot.lane.b32.xlu0 %v1422, 64
    %v1430 = vpop.permute.xlu0 %1429
    %v1432 = vmul.f32 %v1426, %v1430
    %v1433 = vsel %vm215, %v1432, %v1309
    %1434 = vmatprep.subr.mxu0 %v182
    %1435 = vmatpush1.msra.mxu0 %v181
    %1436 = vmatprep.subr.mxu0 %v184
    %1437 = vmatpush1.msra.mxu0 %v183
    %1438 = vmatprep.subr.mxu0 %v186
    %1439 = vmatpush1.msra.mxu0 %v185
    %1440 = vmatprep.subr.mxu0 %v188
    %1441 = vmatpush1.msra.mxu0 %v187
    %1442 = vmatprep.subr.mxu0 %v190
    %1443 = vmatpush1.msra.mxu0 %v189
    %1444 = vmatprep.subr.mxu0 %v192
    %1445 = vmatpush1.msra.mxu0 %v191
    %1446 = vmatprep.subr.mxu0 %v194
    %1447 = vmatpush1.msra.mxu0 %v193
    %1448 = vmatprep.subr.mxu0 %v196
    %1449 = vmatpush1.msra.mxu0 %v195
    %1450 = vmatprep.subr.mxu0 %v198
    %1451 = vmatpush1.msra.mxu0 %v197
    %1452 = vmatprep.subr.mxu0 %v200
    %1453 = vmatpush1.msra.mxu0 %v199
    %1454 = vmatprep.subr.mxu0 %v202
    %1455 = vmatpush1.msra.mxu0 %v201
    %1456 = vmatprep.subr.mxu0 %v204
    %1457 = vmatpush1.msra.mxu0 %v203
    %1458 = vmatprep.subr.mxu0 %v206
    %1459 = vmatpush1.msra.mxu0 %v205
    %1460 = vmatprep.subr.mxu0 %v208
    %1461 = vmatpush1.msra.mxu0 %v207
    %1462 = vmatprep.subr.mxu0 %v210
    %1463 = vmatpush1.msra.mxu0 %v209
    %1464 = vmatprep.subr.mxu0 %v212
    %1465 = vmatpush1.msra.mxu0 %v211
    %1466 = vmatprep.subr.mxu0 0.0
    %1467 = vmatpush1.msra.mxu0 0.0
    %1468 = vmatprep.subr.mxu0 0.0
    %1469 = vmatpush1.msra.mxu0 0.0
    %1470 = vmatprep.subr.mxu0 0.0
    %1471 = vmatpush1.msra.mxu0 0.0
    %1472 = vmatprep.subr.mxu0 0.0
    %1473 = vmatpush1.msra.mxu0 0.0
    %1474 = vmatprep.subr.mxu0 0.0
    %1475 = vmatpush1.msra.mxu0 0.0
    %1476 = vmatprep.subr.mxu0 0.0
    %1477 = vmatpush1.msra.mxu0 0.0
    %1478 = vmatprep.subr.mxu0 0.0
    %1479 = vmatpush1.msra.mxu0 0.0
    %1480 = vmatprep.subr.mxu0 0.0
    %1481 = vmatpush1.msra.mxu0 0.0
    %1482 = vmatprep.subr.mxu0 0.0
    %1483 = vmatpush1.msra.mxu0 0.0
    %1484 = vmatprep.subr.mxu0 0.0
    %1485 = vmatpush1.msra.mxu0 0.0
    %1486 = vmatprep.subr.mxu0 0.0
    %1487 = vmatpush1.msra.mxu0 0.0
    %1488 = vmatprep.subr.mxu0 0.0
    %1489 = vmatpush1.msra.mxu0 0.0
    %1490 = vmatprep.subr.mxu0 0.0
    %1491 = vmatpush1.msra.mxu0 0.0
    %1492 = vmatprep.subr.mxu0 0.0
    %1493 = vmatpush1.msra.mxu0 0.0
    %1494 = vmatprep.subr.mxu0 0.0
    %1495 = vmatpush1.msra.mxu0 0.0
    %1496 = vmatprep.subr.mxu0 0.0
    %1497 = vmatpush1.msra.mxu0 0.0
    %1498 = vmatprep.mubr.f32.mxu0 0.0
    %1499 = vmatmul.mubr.f32.gmra.mrb[0].mxu0 %v1433
    %v1500 = vpop.f32.mrb[0].mxu0
    %v1501 = vadd.f32 %v342, %v1500
    %v1502 = vpop.f32.mrb[0].mxu0
    %v1503 = vadd.f32 %v346, %v1502
    %1504 = vdwg.mxu0
    %v1505 = vxor.u32 %v1501, 2147483648
    %v1506 = vxor.u32 %v1503, 2147483648
    %v1507 = vmul.f32 %v1505, 1.442695
    %v1508 = vpow.pop %v1507
    %v1509 = vmul.f32 %v1506, 1.442695
    %v1510 = vpow.pop %v1509
    %v1511 = vadd.f32 %v1508, 1.0
    %v1512 = vadd.f32 %v1510, 1.0
    %v1513 = vrcp.pop %v1511
    %v1514 = vmul.f32 1.0, %v1513
    %v1515 = vrcp.pop %v1512
    %v1516 = vmul.f32 1.0, %v1515
    %v1517 = vtanh.pop %v1503
    %v1518 = vmul.f32 %v1514, %v1307
    %v1519 = vmul.f32 %v1514, %v1517
    %1521 = vrot.lane.b32.xlu0 %v1519, 64
    %v1522 = vpop.permute.xlu0 %1521
    %v1524 = vadd.f32 %v1518, %v1522
    %v1525 = vtanh.pop %v1524
    %v1526 = vmul.f32 %v1516, %v1525
    %s1527 = scalar_lea.vmem [#allocation2], 6
    %v1528 = vld [vmem:[%s1527] ss:$8 sm:$0x3]
    %v1530 = vsel %vm215, %v1432, 0
    %1532 = vmatprep.subr.mxu0 %v166
    %1533 = vmatpush1.msra.mxu0 %v165
    %1534 = vmatprep.subr.mxu0 %v168
    %1535 = vmatpush1.msra.mxu0 %v167
    %1536 = vmatprep.subr.mxu0 %v170
    %1537 = vmatpush1.msra.mxu0 %v169
    %1538 = vmatprep.subr.mxu0 %v172
    %1539 = vmatpush1.msra.mxu0 %v171
    %1540 = vmatprep.subr.mxu0 %v174
    %1541 = vmatpush1.msra.mxu0 %v173
    %1542 = vmatprep.subr.mxu0 %v176
    %1543 = vmatpush1.msra.mxu0 %v175
    %1544 = vmatprep.subr.mxu0 %v178
    %1545 = vmatpush1.msra.mxu0 %v177
    %1546 = vmatprep.subr.mxu0 %v180
    %1547 = vmatpush1.msra.mxu0 %v179
    %1548 = vmatprep.subr.mxu0 0.0
    %1549 = vmatpush1.msra.mxu0 0.0
    %1550 = vmatprep.subr.mxu0 0.0
    %1551 = vmatpush1.msra.mxu0 0.0
    %1552 = vmatprep.subr.mxu0 0.0
    %1553 = vmatpush1.msra.mxu0 0.0
    %1554 = vmatprep.subr.mxu0 0.0
    %1555 = vmatpush1.msra.mxu0 0.0
    %1556 = vmatprep.subr.mxu0 0.0
    %1557 = vmatpush1.msra.mxu0 0.0
    %1558 = vmatprep.subr.mxu0 0.0
    %1559 = vmatpush1.msra.mxu0 0.0
    %1560 = vmatprep.subr.mxu0 0.0
    %1561 = vmatpush1.msra.mxu0 0.0
    %1562 = vmatprep.subr.mxu0 0.0
    %1563 = vmatpush1.msra.mxu0 0.0
    %1564 = vmatprep.subr.mxu0 0.0
    %1565 = vmatpush1.msra.mxu0 0.0
    %1566 = vmatprep.subr.mxu0 0.0
    %1567 = vmatpush1.msra.mxu0 0.0
    %1568 = vmatprep.subr.mxu0 0.0
    %1569 = vmatpush1.msra.mxu0 0.0
    %1570 = vmatprep.subr.mxu0 0.0
    %1571 = vmatpush1.msra.mxu0 0.0
    %1572 = vmatprep.subr.mxu0 0.0
    %1573 = vmatpush1.msra.mxu0 0.0
    %1574 = vmatprep.subr.mxu0 0.0
    %1575 = vmatpush1.msra.mxu0 0.0
    %1576 = vmatprep.subr.mxu0 0.0
    %1577 = vmatpush1.msra.mxu0 0.0
    %1578 = vmatprep.subr.mxu0 0.0
    %1579 = vmatpush1.msra.mxu0 0.0
    %1580 = vmatprep.subr.mxu0 0.0
    %1581 = vmatpush1.msra.mxu0 0.0
    %1582 = vmatprep.subr.mxu0 0.0
    %1583 = vmatpush1.msra.mxu0 0.0
    %1584 = vmatprep.subr.mxu0 0.0
    %1585 = vmatpush1.msra.mxu0 0.0
    %1586 = vmatprep.subr.mxu0 0.0
    %1587 = vmatpush1.msra.mxu0 0.0
    %1588 = vmatprep.subr.mxu0 0.0
    %1589 = vmatpush1.msra.mxu0 0.0
    %1590 = vmatprep.subr.mxu0 0.0
    %1591 = vmatpush1.msra.mxu0 0.0
    %1592 = vmatprep.subr.mxu0 0.0
    %1593 = vmatpush1.msra.mxu0 0.0
    %1594 = vmatprep.subr.mxu0 0.0
    %1595 = vmatpush1.msra.mxu0 0.0
    %1596 = vmatprep.mubr.f32.mxu0 0.0
    %1597 = vmatmul.mubr.f32.gmra.mrb[0].mxu0 %v1530
    %v1598 = vpop.f32.mrb[0].mxu0
    %v1599 = vadd.f32 0.0, %v1598
    %v1600 = vpop.f32.mrb[0].mxu0
    %v1601 = vadd.f32 0.0, %v1600
    %1602 = vdwg.mxu0
    %v1605 = vcombine.low %v1599, %v1601
    %v1607 = vunpack.c.l.s4 1966171168
    %v1608 = vunpack.c.0.s8 %v1607
    %v1609 = vlaneseq
    %v1610 = vshrl.u32 %v1609, 7
    %v1611 = vsub.s32 %v1608, %v1610
    %v1612 = vrot.slane %v1605, %v1611
    %v1614 = vunpack.c.l.s4 1966171168
    %v1615 = vunpack.c.0.s8 %v1614
    %v1616 = vlaneseq
    %v1617 = vshrl.u32 %v1616, 7
    %v1618 = vsub.s32 %v1615, %v1617
    %v1619 = vrot.slane %v1612, %v1618
    %v1621 = vadd.f32 %v1528, %v1619
    %v1622 = vxor.u32 %v1621, 2147483648
    %v1623 = vmul.f32 %v1622, 1.442695
    %v1624 = vpow.pop %v1623
    %v1625 = vadd.f32 %v1624, 1.0
    %v1626 = vrcp.pop %v1625
    %v1627 = vmul.f32 1.0, %v1626
    %v1628 = vtanh.pop %v1621
    %v1629 = vmul.f32 %v1627, %v1421
    %v1631 = vrot.slane %v1628, 1
    %v1633 = vmul.f32 %v1627, %v1631
    %1635 = vrot.lane.b32.xlu0 %v1633, 64
    %v1636 = vpop.permute.xlu0 %1635
    %v1638 = vadd.f32 %v1629, %v1636
    %v1639 = vtanh.pop %v1638
    %1641 = vrot.lane.b32.xlu0 %v1627, 64
    %v1642 = vpop.permute.xlu0 %1641
    %v1643 = vrot.slane %v1642, 1
    %1646 = vrot.lane.b32.xlu0 %v1639, 64
    %v1647 = vpop.permute.xlu0 %1646
    %v1649 = vmul.f32 %v1643, %v1647
    %v1650 = vsel %vm215, %v1649, %v1526
    %1651 = vmatprep.subr.mxu0 %v182
    %1652 = vmatpush1.msra.mxu0 %v181
    %1653 = vmatprep.subr.mxu0 %v184
    %1654 = vmatpush1.msra.mxu0 %v183
    %1655 = vmatprep.subr.mxu0 %v186
    %1656 = vmatpush1.msra.mxu0 %v185
    %1657 = vmatprep.subr.mxu0 %v188
    %1658 = vmatpush1.msra.mxu0 %v187
    %1659 = vmatprep.subr.mxu0 %v190
    %1660 = vmatpush1.msra.mxu0 %v189
    %1661 = vmatprep.subr.mxu0 %v192
    %1662 = vmatpush1.msra.mxu0 %v191
    %1663 = vmatprep.subr.mxu0 %v194
    %1664 = vmatpush1.msra.mxu0 %v193
    %1665 = vmatprep.subr.mxu0 %v196
    %1666 = vmatpush1.msra.mxu0 %v195
    %1667 = vmatprep.subr.mxu0 %v198
    %1668 = vmatpush1.msra.mxu0 %v197
    %1669 = vmatprep.subr.mxu0 %v200
    %1670 = vmatpush1.msra.mxu0 %v199
    %1671 = vmatprep.subr.mxu0 %v202
    %1672 = vmatpush1.msra.mxu0 %v201
    %1673 = vmatprep.subr.mxu0 %v204
    %1674 = vmatpush1.msra.mxu0 %v203
    %1675 = vmatprep.subr.mxu0 %v206
    %1676 = vmatpush1.msra.mxu0 %v205
    %1677 = vmatprep.subr.mxu0 %v208
    %1678 = vmatpush1.msra.mxu0 %v207
    %1679 = vmatprep.subr.mxu0 %v210
    %1680 = vmatpush1.msra.mxu0 %v209
    %1681 = vmatprep.subr.mxu0 %v212
    %1682 = vmatpush1.msra.mxu0 %v211
    %1683 = vmatprep.subr.mxu0 0.0
    %1684 = vmatpush1.msra.mxu0 0.0
    %1685 = vmatprep.subr.mxu0 0.0
    %1686 = vmatpush1.msra.mxu0 0.0
    %1687 = vmatprep.subr.mxu0 0.0
    %1688 = vmatpush1.msra.mxu0 0.0
    %1689 = vmatprep.subr.mxu0 0.0
    %1690 = vmatpush1.msra.mxu0 0.0
    %1691 = vmatprep.subr.mxu0 0.0
    %1692 = vmatpush1.msra.mxu0 0.0
    %1693 = vmatprep.subr.mxu0 0.0
    %1694 = vmatpush1.msra.mxu0 0.0
    %1695 = vmatprep.subr.mxu0 0.0
    %1696 = vmatpush1.msra.mxu0 0.0
    %1697 = vmatprep.subr.mxu0 0.0
    %1698 = vmatpush1.msra.mxu0 0.0
    %1699 = vmatprep.subr.mxu0 0.0
    %1700 = vmatpush1.msra.mxu0 0.0
    %1701 = vmatprep.subr.mxu0 0.0
    %1702 = vmatpush1.msra.mxu0 0.0
    %1703 = vmatprep.subr.mxu0 0.0
    %1704 = vmatpush1.msra.mxu0 0.0
    %1705 = vmatprep.subr.mxu0 0.0
    %1706 = vmatpush1.msra.mxu0 0.0
    %1707 = vmatprep.subr.mxu0 0.0
    %1708 = vmatpush1.msra.mxu0 0.0
    %1709 = vmatprep.subr.mxu0 0.0
    %1710 = vmatpush1.msra.mxu0 0.0
    %1711 = vmatprep.subr.mxu0 0.0
    %1712 = vmatpush1.msra.mxu0 0.0
    %1713 = vmatprep.subr.mxu0 0.0
    %1714 = vmatpush1.msra.mxu0 0.0
    %1715 = vmatprep.mubr.f32.mxu0 0.0
    %1716 = vmatmul.mubr.f32.gmra.mrb[0].mxu0 %v1650
    %v1717 = vpop.f32.mrb[0].mxu0
    %v1718 = vadd.f32 %v342, %v1717
    %v1719 = vpop.f32.mrb[0].mxu0
    %v1720 = vadd.f32 %v346, %v1719
    %1721 = vdwg.mxu0
    %v1722 = vxor.u32 %v1718, 2147483648
    %v1723 = vxor.u32 %v1720, 2147483648
    %v1724 = vmul.f32 %v1722, 1.442695
    %v1725 = vpow.pop %v1724
    %v1726 = vmul.f32 %v1723, 1.442695
    %v1727 = vpow.pop %v1726
    %v1728 = vadd.f32 %v1725, 1.0
    %v1729 = vadd.f32 %v1727, 1.0
    %v1730 = vrcp.pop %v1728
    %v1731 = vmul.f32 1.0, %v1730
    %v1732 = vrcp.pop %v1729
    %v1733 = vmul.f32 1.0, %v1732
    %v1734 = vtanh.pop %v1720
    %v1735 = vmul.f32 %v1731, %v1524
    %v1736 = vmul.f32 %v1731, %v1734
    %1738 = vrot.lane.b32.xlu0 %v1736, 64
    %v1739 = vpop.permute.xlu0 %1738
    %v1741 = vadd.f32 %v1735, %v1739
    %v1742 = vtanh.pop %v1741
    %v1743 = vmul.f32 %v1733, %v1742
    %s1744 = scalar_lea.vmem [#allocation2], 7
    %v1745 = vld [vmem:[%s1744] ss:$8 sm:$0x3]
    %v1747 = vsel %vm215, %v1649, 0
    %1749 = vmatprep.subr.mxu0 %v166
    %1750 = vmatpush1.msra.mxu0 %v165
    %1751 = vmatprep.subr.mxu0 %v168
    %1752 = vmatpush1.msra.mxu0 %v167
    %1753 = vmatprep.subr.mxu0 %v170
    %1754 = vmatpush1.msra.mxu0 %v169
    %1755 = vmatprep.subr.mxu0 %v172
    %1756 = vmatpush1.msra.mxu0 %v171
    %1757 = vmatprep.subr.mxu0 %v174
    %1758 = vmatpush1.msra.mxu0 %v173
    %1759 = vmatprep.subr.mxu0 %v176
    %1760 = vmatpush1.msra.mxu0 %v175
    %1761 = vmatprep.subr.mxu0 %v178
    %1762 = vmatpush1.msra.mxu0 %v177
    %1763 = vmatprep.subr.mxu0 %v180
    %1764 = vmatpush1.msra.mxu0 %v179
    %1765 = vmatprep.subr.mxu0 0.0
    %1766 = vmatpush1.msra.mxu0 0.0
    %1767 = vmatprep.subr.mxu0 0.0
    %1768 = vmatpush1.msra.mxu0 0.0
    %1769 = vmatprep.subr.mxu0 0.0
    %1770 = vmatpush1.msra.mxu0 0.0
    %1771 = vmatprep.subr.mxu0 0.0
    %1772 = vmatpush1.msra.mxu0 0.0
    %1773 = vmatprep.subr.mxu0 0.0
    %1774 = vmatpush1.msra.mxu0 0.0
    %1775 = vmatprep.subr.mxu0 0.0
    %1776 = vmatpush1.msra.mxu0 0.0
    %1777 = vmatprep.subr.mxu0 0.0
    %1778 = vmatpush1.msra.mxu0 0.0
    %1779 = vmatprep.subr.mxu0 0.0
    %1780 = vmatpush1.msra.mxu0 0.0
    %1781 = vmatprep.subr.mxu0 0.0
    %1782 = vmatpush1.msra.mxu0 0.0
    %1783 = vmatprep.subr.mxu0 0.0
    %1784 = vmatpush1.msra.mxu0 0.0
    %1785 = vmatprep.subr.mxu0 0.0
    %1786 = vmatpush1.msra.mxu0 0.0
    %1787 = vmatprep.subr.mxu0 0.0
    %1788 = vmatpush1.msra.mxu0 0.0
    %1789 = vmatprep.subr.mxu0 0.0
    %1790 = vmatpush1.msra.mxu0 0.0
    %1791 = vmatprep.subr.mxu0 0.0
    %1792 = vmatpush1.msra.mxu0 0.0
    %1793 = vmatprep.subr.mxu0 0.0
    %1794 = vmatpush1.msra.mxu0 0.0
    %1795 = vmatprep.subr.mxu0 0.0
    %1796 = vmatpush1.msra.mxu0 0.0
    %1797 = vmatprep.subr.mxu0 0.0
    %1798 = vmatpush1.msra.mxu0 0.0
    %1799 = vmatprep.subr.mxu0 0.0
    %1800 = vmatpush1.msra.mxu0 0.0
    %1801 = vmatprep.subr.mxu0 0.0
    %1802 = vmatpush1.msra.mxu0 0.0
    %1803 = vmatprep.subr.mxu0 0.0
    %1804 = vmatpush1.msra.mxu0 0.0
    %1805 = vmatprep.subr.mxu0 0.0
    %1806 = vmatpush1.msra.mxu0 0.0
    %1807 = vmatprep.subr.mxu0 0.0
    %1808 = vmatpush1.msra.mxu0 0.0
    %1809 = vmatprep.subr.mxu0 0.0
    %1810 = vmatpush1.msra.mxu0 0.0
    %1811 = vmatprep.subr.mxu0 0.0
    %1812 = vmatpush1.msra.mxu0 0.0
    %1813 = vmatprep.mubr.f32.mxu0 0.0
    %1814 = vmatmul.mubr.f32.gmra.mrb[0].mxu0 %v1747
    %v1815 = vpop.f32.mrb[0].mxu0
    %v1816 = vadd.f32 0.0, %v1815
    %v1817 = vpop.f32.mrb[0].mxu0
    %v1818 = vadd.f32 0.0, %v1817
    %1819 = vdwg.mxu0
    %v1822 = vcombine.low %v1816, %v1818
    %v1824 = vunpack.c.l.s4 1966171168
    %v1825 = vunpack.c.0.s8 %v1824
    %v1826 = vlaneseq
    %v1827 = vshrl.u32 %v1826, 7
    %v1828 = vsub.s32 %v1825, %v1827
    %v1829 = vrot.slane %v1822, %v1828
    %v1831 = vunpack.c.l.s4 1966171168
    %v1832 = vunpack.c.0.s8 %v1831
    %v1833 = vlaneseq
    %v1834 = vshrl.u32 %v1833, 7
    %v1835 = vsub.s32 %v1832, %v1834
    %v1836 = vrot.slane %v1829, %v1835
    %v1838 = vadd.f32 %v1745, %v1836
    %v1839 = vxor.u32 %v1838, 2147483648
    %v1840 = vmul.f32 %v1839, 1.442695
    %v1841 = vpow.pop %v1840
    %v1842 = vadd.f32 %v1841, 1.0
    %v1843 = vrcp.pop %v1842
    %v1844 = vmul.f32 1.0, %v1843
    %v1845 = vtanh.pop %v1838
    %v1846 = vmul.f32 %v1844, %v1638
    %v1848 = vrot.slane %v1845, 1
    %v1850 = vmul.f32 %v1844, %v1848
    %1852 = vrot.lane.b32.xlu0 %v1850, 64
    %v1853 = vpop.permute.xlu0 %1852
    %v1855 = vadd.f32 %v1846, %v1853
    %v1856 = vtanh.pop %v1855
    %1858 = vrot.lane.b32.xlu0 %v1844, 64
    %v1859 = vpop.permute.xlu0 %1858
    %v1860 = vrot.slane %v1859, 1
    %1863 = vrot.lane.b32.xlu0 %v1856, 64
    %v1864 = vpop.permute.xlu0 %1863
    %v1866 = vmul.f32 %v1860, %v1864
    %v1867 = vsel %vm215, %v1866, %v1743
    %1868 = vmatprep.subr.mxu0 %v182
    %1869 = vmatpush1.msra.mxu0 %v181
    %1870 = vmatprep.subr.mxu0 %v184
    %1871 = vmatpush1.msra.mxu0 %v183
    %1872 = vmatprep.subr.mxu0 %v186
    %1873 = vmatpush1.msra.mxu0 %v185
    %1874 = vmatprep.subr.mxu0 %v188
    %1875 = vmatpush1.msra.mxu0 %v187
    %1876 = vmatprep.subr.mxu0 %v190
    %1877 = vmatpush1.msra.mxu0 %v189
    %1878 = vmatprep.subr.mxu0 %v192
    %1879 = vmatpush1.msra.mxu0 %v191
    %1880 = vmatprep.subr.mxu0 %v194
    %1881 = vmatpush1.msra.mxu0 %v193
    %1882 = vmatprep.subr.mxu0 %v196
    %1883 = vmatpush1.msra.mxu0 %v195
    %1884 = vmatprep.subr.mxu0 %v198
    %1885 = vmatpush1.msra.mxu0 %v197
    %1886 = vmatprep.subr.mxu0 %v200
    %1887 = vmatpush1.msra.mxu0 %v199
    %1888 = vmatprep.subr.mxu0 %v202
    %1889 = vmatpush1.msra.mxu0 %v201
    %1890 = vmatprep.subr.mxu0 %v204
    %1891 = vmatpush1.msra.mxu0 %v203
    %1892 = vmatprep.subr.mxu0 %v206
    %1893 = vmatpush1.msra.mxu0 %v205
    %1894 = vmatprep.subr.mxu0 %v208
    %1895 = vmatpush1.msra.mxu0 %v207
    %1896 = vmatprep.subr.mxu0 %v210
    %1897 = vmatpush1.msra.mxu0 %v209
    %1898 = vmatprep.subr.mxu0 %v212
    %1899 = vmatpush1.msra.mxu0 %v211
    %1900 = vmatprep.subr.mxu0 0.0
    %1901 = vmatpush1.msra.mxu0 0.0
    %1902 = vmatprep.subr.mxu0 0.0
    %1903 = vmatpush1.msra.mxu0 0.0
    %1904 = vmatprep.subr.mxu0 0.0
    %1905 = vmatpush1.msra.mxu0 0.0
    %1906 = vmatprep.subr.mxu0 0.0
    %1907 = vmatpush1.msra.mxu0 0.0
    %1908 = vmatprep.subr.mxu0 0.0
    %1909 = vmatpush1.msra.mxu0 0.0
    %1910 = vmatprep.subr.mxu0 0.0
    %1911 = vmatpush1.msra.mxu0 0.0
    %1912 = vmatprep.subr.mxu0 0.0
    %1913 = vmatpush1.msra.mxu0 0.0
    %1914 = vmatprep.subr.mxu0 0.0
    %1915 = vmatpush1.msra.mxu0 0.0
    %1916 = vmatprep.subr.mxu0 0.0
    %1917 = vmatpush1.msra.mxu0 0.0
    %1918 = vmatprep.subr.mxu0 0.0
    %1919 = vmatpush1.msra.mxu0 0.0
    %1920 = vmatprep.subr.mxu0 0.0
    %1921 = vmatpush1.msra.mxu0 0.0
    %1922 = vmatprep.subr.mxu0 0.0
    %1923 = vmatpush1.msra.mxu0 0.0
    %1924 = vmatprep.subr.mxu0 0.0
    %1925 = vmatpush1.msra.mxu0 0.0
    %1926 = vmatprep.subr.mxu0 0.0
    %1927 = vmatpush1.msra.mxu0 0.0
    %1928 = vmatprep.subr.mxu0 0.0
    %1929 = vmatpush1.msra.mxu0 0.0
    %1930 = vmatprep.subr.mxu0 0.0
    %1931 = vmatpush1.msra.mxu0 0.0
    %1932 = vmatprep.mubr.f32.mxu0 0.0
    %1933 = vmatmul.mubr.f32.gmra.mrb[0].mxu0 %v1867
    %v1934 = vpop.f32.mrb[0].mxu0
    %v1935 = vadd.f32 %v342, %v1934
    %v1936 = vpop.f32.mrb[0].mxu0
    %v1937 = vadd.f32 %v346, %v1936
    %1938 = vdwg.mxu0
    %v1939 = vxor.u32 %v1935, 2147483648
    %v1940 = vxor.u32 %v1937, 2147483648
    %v1941 = vmul.f32 %v1939, 1.442695
    %v1942 = vpow.pop %v1941
    %v1943 = vmul.f32 %v1940, 1.442695
    %v1944 = vpow.pop %v1943
    %v1945 = vadd.f32 %v1942, 1.0
    %v1946 = vadd.f32 %v1944, 1.0
    %v1947 = vrcp.pop %v1945
    %v1948 = vmul.f32 1.0, %v1947
    %v1949 = vrcp.pop %v1946
    %v1950 = vmul.f32 1.0, %v1949
    %v1951 = vtanh.pop %v1937
    %v1952 = vmul.f32 %v1948, %v1741
    %v1953 = vmul.f32 %v1948, %v1951
    %1955 = vrot.lane.b32.xlu0 %v1953, 64
    %v1956 = vpop.permute.xlu0 %1955
    %v1958 = vadd.f32 %v1952, %v1956
    %v1959 = vtanh.pop %v1958
    %v1960 = vmul.f32 %v1950, %v1959
    %v1961 = vld [vmem:[%s6] sm:$0xff]
    %v1962 = vld [vmem:[%s6 + $0x8] sm:$0xff]
    %v1963 = vld [vmem:[%s6 + $0x10] sm:$0xff]
    %v1964 = vld [vmem:[%s6 + $0x18] sm:$0xff]
    %v1965 = vld [vmem:[%s6 + $0x20] sm:$0xff]
    %v1966 = vld [vmem:[%s6 + $0x28] sm:$0xff]
    %v1967 = vld [vmem:[%s6 + $0x30] sm:$0xff]
    %v1968 = vld [vmem:[%s6 + $0x38] sm:$0xff]
    %v1969 = vld [vmem:[#allocation3] sm:$0x1]
    %1971 = vrot.lane.b32.xlu0 %v1960, 64
    %v1972 = vpop.permute.xlu0 %1971
    %v1973 = vsel %vm215, %v1972, 0
    %1975 = vmatprep.subr.mxu0 0.0
    %1976 = vmatpush1.msra.mxu0 %v1961
    %1977 = vmatprep.subr.mxu0 0.0
    %1978 = vmatpush1.msra.mxu0 %v1962
    %1979 = vmatprep.subr.mxu0 0.0
    %1980 = vmatpush1.msra.mxu0 %v1963
    %1981 = vmatprep.subr.mxu0 0.0
    %1982 = vmatpush1.msra.mxu0 %v1964
    %1983 = vmatprep.subr.mxu0 0.0
    %1984 = vmatpush1.msra.mxu0 %v1965
    %1985 = vmatprep.subr.mxu0 0.0
    %1986 = vmatpush1.msra.mxu0 %v1966
    %1987 = vmatprep.subr.mxu0 0.0
    %1988 = vmatpush1.msra.mxu0 %v1967
    %1989 = vmatprep.subr.mxu0 0.0
    %1990 = vmatpush1.msra.mxu0 %v1968
    %1991 = vmatprep.subr.mxu0 0.0
    %1992 = vmatpush1.msra.mxu0 0.0
    %1993 = vmatprep.subr.mxu0 0.0
    %1994 = vmatpush1.msra.mxu0 0.0
    %1995 = vmatprep.subr.mxu0 0.0
    %1996 = vmatpush1.msra.mxu0 0.0
    %1997 = vmatprep.subr.mxu0 0.0
    %1998 = vmatpush1.msra.mxu0 0.0
    %1999 = vmatprep.subr.mxu0 0.0
    %2000 = vmatpush1.msra.mxu0 0.0
    %2001 = vmatprep.subr.mxu0 0.0
    %2002 = vmatpush1.msra.mxu0 0.0
    %2003 = vmatprep.subr.mxu0 0.0
    %2004 = vmatpush1.msra.mxu0 0.0
    %2005 = vmatprep.subr.mxu0 0.0
    %2006 = vmatpush1.msra.mxu0 0.0
    %2007 = vmatprep.subr.mxu0 0.0
    %2008 = vmatpush1.msra.mxu0 0.0
    %2009 = vmatprep.subr.mxu0 0.0
    %2010 = vmatpush1.msra.mxu0 0.0
    %2011 = vmatprep.subr.mxu0 0.0
    %2012 = vmatpush1.msra.mxu0 0.0
    %2013 = vmatprep.subr.mxu0 0.0
    %2014 = vmatpush1.msra.mxu0 0.0
    %2015 = vmatprep.subr.mxu0 0.0
    %2016 = vmatpush1.msra.mxu0 0.0
    %2017 = vmatprep.subr.mxu0 0.0
    %2018 = vmatpush1.msra.mxu0 0.0
    %2019 = vmatprep.subr.mxu0 0.0
    %2020 = vmatpush1.msra.mxu0 0.0
    %2021 = vmatprep.subr.mxu0 0.0
    %2022 = vmatpush1.msra.mxu0 0.0
    %2023 = vmatprep.subr.mxu0 0.0
    %2024 = vmatpush1.msra.mxu0 0.0
    %2025 = vmatprep.subr.mxu0 0.0
    %2026 = vmatpush1.msra.mxu0 0.0
    %2027 = vmatprep.subr.mxu0 0.0
    %2028 = vmatpush1.msra.mxu0 0.0
    %2029 = vmatprep.subr.mxu0 0.0
    %2030 = vmatpush1.msra.mxu0 0.0
    %2031 = vmatprep.subr.mxu0 0.0
    %2032 = vmatpush1.msra.mxu0 0.0
    %2033 = vmatprep.subr.mxu0 0.0
    %2034 = vmatpush1.msra.mxu0 0.0
    %2035 = vmatprep.subr.mxu0 0.0
    %2036 = vmatpush1.msra.mxu0 0.0
    %2037 = vmatprep.subr.mxu0 0.0
    %2038 = vmatpush1.msra.mxu0 0.0
    %2039 = vmatprep.mubr.f32.mxu0 0.0
    %2040 = vmatmul.mubr.f32.gmra.mrb[0].mxu0 %v1973
    %v2041 = vpop.f32.mrb[0].mxu0
    %v2042 = vadd.f32 %v1969, %v2041
    %v2043 = vpop.f32.mrb[0].mxu0
    %2044 = vdwg.mxu0
    %vm2045 = vcmask 0
    %2046 = vst.msk [vmem:[#allocation9] sm:$0x1] %vm2045, %v2042
    // Predicated region
    $region42: #{tpu_custom_call.1} parent=1 // pred_check
      _
    $region43: #{tpu_custom_call.1} parent=1 // pred_check_branch
      %2048 = sbr.rel (0) target = $region45
    $region44: #{tpu_custom_call.1} parent=1 // pred_region
      %s2050 = ssub.s32 16, 16
      %2051 = vsyncadd [#allocation6], %s2050
      %s2053 = sshll.u32 [#allocation9], 4
      %s2054 = int_to_ptr.vmem [resolvable:$true] %s2053
      %2056 = dma.vmem_to_hbm [thread:$0]  %s2054, 16, %s8, [#allocation6]
    $region45: #{tpu_custom_call.1} parent=1 // pred_fallthru
      _
    // Predicated region
    $region46: #{tpu_custom_call.1} parent=1 // pred_check
      _
    $region47: #{tpu_custom_call.1} parent=1 // pred_check_branch
      %2058 = sbr.rel (0) target = $region49
    $region48: #{tpu_custom_call.1} parent=1 // pred_region
      %2059 = dma.done [#allocation6], 16
    $region49: #{tpu_custom_call.1} parent=1 // pred_fallthru
      _
    %2060 = vsyncpa [#allocation5], 1
    %2061 = vsyncpa [#allocation8], 1
    %2062 = vsyncpa [#allocation6], 1

</llo_original>
